<compile_context>
chip_gen: v7x
topology: tpu7x:2x2x1
jax: 0.10.0
libtpu: 0.0.40
codegen_flags: <defaults>
</compile_context>

<pallas_src>
import functools

import numpy as np
import jax
import jax.numpy as jnp
from jax import lax
from jax.experimental import pallas as pl
from jax.experimental.pallas import tpu as pltpu


# ---------------------------- wrapper-side constants ----------------------------

def _bilinear_matrix(in_size: int, out_size: int) -> np.ndarray:
    """Interpolation matrix A (out_size, in_size) for bilinear, align_corners=True."""
    A = np.zeros((out_size, in_size), dtype=np.float32)
    if in_size == 1:
        A[:, 0] = 1.0
        return A
    scale = (in_size - 1) / (out_size - 1)
    for o in range(out_size):
        src = o * scale
        i0 = min(int(np.floor(src)), in_size - 1)
        i1 = min(i0 + 1, in_size - 1)
        f = src - i0
        A[o, i0] += 1.0 - f
        A[o, i1] += f
    return A


def _banded_conv_weights(w9, W: int, C: int) -> np.ndarray:
    """Banded matrices for a 3x3 SAME conv on the (H, W*C) lane layout.

    w9: (9, Cin, Cout), tap-major (t = ky*3 + kx).
    Returns band (3, (W+2)*C, W*C) with
      band[ky, (wo+kx)*C + ci, wo*C + co] = w9[ky*3 + kx, ci, co],
    so that  conv_out = sum_ky  pad[ky:ky+H, :] @ band[ky].
    """
    w = np.asarray(w9, np.float32).reshape(3, 3, C, C)
    band = np.zeros((3, (W + 2) * C, W * C), np.float32)
    for ky in range(3):
        for kx in range(3):
            for wo in range(W):
                band[ky,
                     (wo + kx) * C:(wo + kx + 1) * C,
                     wo * C:(wo + 1) * C] = w[ky, kx]
    return band


def _width_block_matrix(W: int, C: int) -> np.ndarray:
    """Block-banded width-upsample matrix M (W*C, 2W*C):
       (r @ M)[h, q*C + c] = sum_w A[q, w] * r[h, w*C + c]."""
    A = _bilinear_matrix(W, 2 * W)          # (2W, W)
    eye = np.eye(C, dtype=np.float32)
    M = np.zeros((W * C, 2 * W * C), np.float32)
    for q in range(2 * W):
        for w in range(W):
            a = A[q, w]
            if a != 0.0:
                M[w * C:(w + 1) * C, q * C:(q + 1) * C] += a * eye
    return M


# ------------------------------------ kernel ------------------------------------

def _fusion_kernel(x0_ref, x1_ref, band_ref, bias_ref, ah_ref, aw_ref,
                   o_ref, pad_ref, *, C):
    """One batch element per grid step.

    x*_ref  : (1, H, W*C)   f32   lane-flattened NHWC inputs
    band_ref: (4, 3, (W+2)*C, W*C) bf16  banded conv weights (conv idx, ky)
    bias_ref: (4, W*C)      f32   conv bias pre-tiled along W
    ah_ref  : (2H, H)       bf16  height interpolation matrix (align_corners=True)
    aw_ref  : (W*C, 2W*C)   bf16  block-banded width interpolation matrix
    o_ref   : (1, 2H, 2W*C)       lane-dense output tile
    pad_ref : (H+2, (W+2)*C) f32  zero-bordered conv-input scratch
    """
    H = x0_ref.shape[1]
    WC = x0_ref.shape[2]
    W = WC // C
    PWC = (W + 2) * C
    f32 = jnp.float32
    bf16 = jnp.bfloat16

    # Zero only the 1-px border of the padded scratch (4 thin writes per grid step);
    # the interior is fully overwritten by every conv.
    pad_ref[0:1, :] = jnp.zeros((1, PWC), f32)
    pad_ref[H + 1:H + 2, :] = jnp.zeros((1, PWC), f32)
    pad_ref[:, 0:C] = jnp.zeros((H + 2, C), f32)
    pad_ref[:, (W + 1) * C:PWC] = jnp.zeros((H + 2, C), f32)

    def conv3x3(a, k):
        """3x3 SAME conv of an (H, W*C) f32 activation: 3 banded bf16 MXU matmuls
        (f32 accumulation), bias folded once at the end."""
        pad_ref[1:H + 1, C:(W + 1) * C] = a
        y = jnp.dot(pad_ref[0:H, :].astype(bf16), band_ref[k, 0],
                    preferred_element_type=f32)
        y = y + jnp.dot(pad_ref[1:H + 1, :].astype(bf16), band_ref[k, 1],
                        preferred_element_type=f32)
        y = y + jnp.dot(pad_ref[2:H + 2, :].astype(bf16), band_ref[k, 2],
                        preferred_element_type=f32)
        return y + bias_ref[k:k + 1, :]

    def rcu(a, k1, k2):
        h = conv3x3(jnp.maximum(a, 0.0), k1)
        h = conv3x3(jnp.maximum(h, 0.0), k2)
        return h + a

    # output = x0 + resConfUnit1(x1); output = resConfUnit2(output)
    s = rcu(x1_ref[0].astype(f32), 0, 1) + x0_ref[0].astype(f32)
    r = rcu(s, 2, 3)                                             # (H, W*C) f32

    # x2 bilinear upsample (align_corners=True), separable as two MXU matmuls:
    # width (block-banded matrix) then height, stored straight into o_ref.
    wide = jnp.dot(r.astype(bf16), aw_ref[...],
                   preferred_element_type=f32)                   # (H, 2W*C)
    out = jnp.dot(ah_ref[...], wide.astype(bf16),
                  preferred_element_type=f32)                    # (2H, 2W*C)
    o_ref[0] = out.astype(o_ref.dtype)


# ------------------------------------ wrapper ------------------------------------

def feature_fusion_block(x0, x1, params):
    """x0, x1: (B, H, W, C) NHWC float32. Returns (B, 2H, 2W, C)."""
    B, H, W, C = x0.shape
    WC = W * C
    PWC = (W + 2) * C
    (w1a, b1a, w2a, b2a, w1b, b1b, w2b, b2b) = params

    # Lane-dense repacks (contiguous reshapes, done outside the kernel).
    x0f = x0.reshape(B, H, WC)
    x1f = x1.reshape(B, H, WC)

    # One bf16 operand holding all 4 convs' banded weights: (4, 3, (W+2)*C, W*C).
    bands = np.stack([_banded_conv_weights(np.asarray(w), W, C)
                      for w in (w1a, w2a, w1b, w2b)], axis=0)
    bands = jnp.asarray(bands, jnp.bfloat16)
    # Biases pre-tiled to the w*C + c lane layout: (4, W*C) f32.
    biases = jnp.stack(
        [jnp.tile(jnp.asarray(b, jnp.float32).reshape(1, C), (1, W)).reshape(WC)
         for b in (b1a, b2a, b1b, b2b)], axis=0)
    ah = jnp.asarray(_bilinear_matrix(H, 2 * H), jnp.bfloat16)    # (2H, H)
    aw = jnp.asarray(_width_block_matrix(W, C), jnp.bfloat16)     # (W*C, 2W*C)

    def full_spec(shape):
        return pl.BlockSpec(shape, lambda b, n=len(shape): (0,) * n)

    grid_spec = pltpu.PrefetchScalarGridSpec(
        num_scalar_prefetch=0,
        grid=(B,),
        in_specs=[
            pl.BlockSpec((1, H, WC), lambda b: (b, 0, 0)),
            pl.BlockSpec((1, H, WC), lambda b: (b, 0, 0)),
            full_spec((4, 3, PWC, WC)),
            full_spec((4, WC)),
            full_spec((2 * H, H)),
            full_spec((WC, 2 * WC)),
        ],
        out_specs=pl.BlockSpec((1, 2 * H, 2 * WC), lambda b: (b, 0, 0)),
        scratch_shapes=[
            pltpu.VMEM((H + 2, PWC), jnp.float32),   # zero-bordered conv input
        ],
    )

    out_flat = pl.pallas_call(
        functools.partial(_fusion_kernel, C=C),
        out_shape=jax.ShapeDtypeStruct((B, 2 * H, 2 * WC), x0.dtype),
        grid_spec=grid_spec,
        compiler_params=pltpu.CompilerParams(
            dimension_semantics=("parallel",),
            vmem_limit_bytes=32 * 1024 * 1024),
    )(x0f, x1f, bands, biases, ah, aw)

    return out_flat.reshape(B, 2 * H, 2 * W, C)


# ---------------- pure-JAX reference (for correctness check) ----------------

def _rcu_ref(x, w1, b1, w2, b2):
    B, H, W, C = x.shape

    def conv(h, w, b):
        k = w.reshape(3, 3, C, C)  # (ky, kx, Cin, Cout) == HWIO
        y = lax.conv_general_dilated(
            h, k, window_strides=(1, 1), padding="SAME",
            dimension_numbers=("NHWC", "HWIO", "NHWC"))
        return y + b.reshape(1, 1, 1, C)

    out = jnp.maximum(x, 0.0)
    out = conv(out, w1, b1)
    out = jnp.maximum(out, 0.0)
    out = conv(out, w2, b2)
    return out + x


def _fusion_ref(x0, x1, params):
    (w1a, b1a, w2a, b2a, w1b, b1b, w2b, b2b) = params
    B, H, W, C = x0.shape
    out = x0 + _rcu_ref(x1, w1a, b1a, w2a, b2a)
    out = _rcu_ref(out, w1b, b1b, w2b, b2b)
    ah = jnp.asarray(_bilinear_matrix(H, 2 * H))
    aw = jnp.asarray(_bilinear_matrix(W, 2 * W))
    out = jnp.einsum("ph,bhwc->bpwc", ah, out)
    out = jnp.einsum("qw,bpwc->bpqc", aw, out)
    return out


if __name__ == "__main__":
    B, H, W, C = 2, 16, 16, 8  # features = 8; W*C = 128 (lane-dense)

    key = jax.random.PRNGKey(0)
    keys = jax.random.split(key, 12)

    x0 = jax.random.normal(keys[0], (B, H, W, C), jnp.float32)
    x1 = jax.random.normal(keys[1], (B, H, W, C), jnp.float32)

    def wgen(k):  # (9, Cin, Cout), small scale to keep activations tame
        return 0.1 * jax.random.normal(k, (9, C, C), jnp.float32)

    def bgen(k):
        return 0.05 * jax.random.normal(k, (1, C), jnp.float32)

    params = (wgen(keys[2]), bgen(keys[3]), wgen(keys[4]), bgen(keys[5]),
              wgen(keys[6]), bgen(keys[7]), wgen(keys[8]), bgen(keys[9]))

    out = feature_fusion_block(x0, x1, params)
    out = jax.block_until_ready(out)

    ref = jax.block_until_ready(_fusion_ref(x0, x1, params))
    # bf16 MXU operands (f32 accumulation) => relaxed tolerance vs. the f32 reference.
    np.testing.assert_allclose(np.asarray(out), np.asarray(ref), rtol=5e-2, atol=5e-2)

    assert out.shape == (B, 2 * H, 2 * W, C)
    print("KERNEL_OK")
</pallas_src>

<mosaic_0001>
module attributes {stable_mosaic.version = 11 : i64} {
  func.func @_fusion_kernel(%arg0: i32, %arg1: memref<1x16x128xf32, #tpu.memory_space<vmem>>, %arg2: memref<1x16x128xf32, #tpu.memory_space<vmem>>, %arg3: memref<4x3x144x128xbf16, #tpu.memory_space<vmem>>, %arg4: memref<4x128xf32, #tpu.memory_space<vmem>>, %arg5: memref<32x16xbf16, #tpu.memory_space<vmem>>, %arg6: memref<128x256xbf16, #tpu.memory_space<vmem>>, %arg7: memref<1x32x256xf32, #tpu.memory_space<vmem>>, %arg8: memref<18x144xf32, #tpu.memory_space<vmem>>) attributes {dimension_semantics = [#tpu.dimension_semantics<parallel>], iteration_bounds = array<i64: 2>, scalar_prefetch = 0 : i64, scratch_operands = 1 : i64, tpu.core_type = #tpu.core_type<tc>, window_params = [{transform_indices = @transform_0, window_bounds = array<i64: 1, 16, 128>}, {transform_indices = @transform_1, window_bounds = array<i64: 1, 16, 128>}, {pipeline_mode = #tpu.pipeline_mode<synchronous>, transform_indices = @transform_2, window_bounds = array<i64: 4, 3, 144, 128>}, {pipeline_mode = #tpu.pipeline_mode<synchronous>, transform_indices = @transform_3, window_bounds = array<i64: 4, 128>}, {pipeline_mode = #tpu.pipeline_mode<synchronous>, transform_indices = @transform_4, window_bounds = array<i64: 32, 16>}, {pipeline_mode = #tpu.pipeline_mode<synchronous>, transform_indices = @transform_5, window_bounds = array<i64: 128, 256>}, {transform_indices = @transform_6, window_bounds = array<i64: 1, 32, 256>}]} {
    %cst = arith.constant 0.000000e+00 : f32
    %0 = vector.broadcast %cst : f32 to vector<1x144xf32>
    %c0 = arith.constant 0 : index
    %c0_0 = arith.constant 0 : index
    %1 = vector.load %arg8[%c0, %c0_0] : memref<18x144xf32, #tpu.memory_space<vmem>>, vector<1x144xf32>
    tpu.vector_store %arg8[%c0, %c0_0], %0 {strides = array<i32>} : memref<18x144xf32, #tpu.memory_space<vmem>>, vector<1x144xf32>,
    %cst_1 = arith.constant 0.000000e+00 : f32
    %2 = vector.broadcast %cst_1 : f32 to vector<1x144xf32>
    %c17 = arith.constant 17 : index
    %c0_2 = arith.constant 0 : index
    %3 = vector.load %arg8[%c17, %c0_2] : memref<18x144xf32, #tpu.memory_space<vmem>>, vector<1x144xf32>
    tpu.vector_store %arg8[%c17, %c0_2], %2 {strides = array<i32>} : memref<18x144xf32, #tpu.memory_space<vmem>>, vector<1x144xf32>,
    %cst_3 = arith.constant 0.000000e+00 : f32
    %4 = vector.broadcast %cst_3 : f32 to vector<18x8xf32>
    %c0_4 = arith.constant 0 : index
    %c0_5 = arith.constant 0 : index
    %5 = vector.load %arg8[%c0_4, %c0_5] : memref<18x144xf32, #tpu.memory_space<vmem>>, vector<18x8xf32>
    tpu.vector_store %arg8[%c0_4, %c0_5], %4 {strides = array<i32>} : memref<18x144xf32, #tpu.memory_space<vmem>>, vector<18x8xf32>,
    %cst_6 = arith.constant 0.000000e+00 : f32
    %6 = vector.broadcast %cst_6 : f32 to vector<18x8xf32>
    %c0_7 = arith.constant 0 : index
    %c136 = arith.constant 136 : index
    %7 = vector.load %arg8[%c0_7, %c136] : memref<18x144xf32, #tpu.memory_space<vmem>>, vector<18x8xf32>
    tpu.vector_store %arg8[%c0_7, %c136], %6 {strides = array<i32>} : memref<18x144xf32, #tpu.memory_space<vmem>>, vector<18x8xf32>,
    %c0_8 = arith.constant 0 : index
    %c0_9 = arith.constant 0 : index
    %c0_10 = arith.constant 0 : index
    %8 = vector.load %arg2[%c0_8, %c0_9, %c0_10] : memref<1x16x128xf32, #tpu.memory_space<vmem>>, vector<1x16x128xf32>
    %9 = vector.shape_cast %8 : vector<1x16x128xf32> to vector<16x128xf32>
    %cst_11 = arith.constant 0.000000e+00 : f32
    %10 = vector.broadcast %cst_11 : f32 to vector<16x128xf32>
    %11 = arith.maximumf %9, %10 : vector<16x128xf32>
    %c1 = arith.constant 1 : index
    %c8 = arith.constant 8 : index
    %12 = vector.load %arg8[%c1, %c8] : memref<18x144xf32, #tpu.memory_space<vmem>>, vector<16x128xf32>
    tpu.vector_store %arg8[%c1, %c8], %11 {strides = array<i32>} : memref<18x144xf32, #tpu.memory_space<vmem>>, vector<16x128xf32>,
    %c0_12 = arith.constant 0 : index
    %c0_13 = arith.constant 0 : index
    %13 = vector.load %arg8[%c0_12, %c0_13] : memref<18x144xf32, #tpu.memory_space<vmem>>, vector<16x144xf32>
    %14 = arith.truncf %13 : vector<16x144xf32> to vector<16x144xbf16>
    %c0_14 = arith.constant 0 : index
    %c0_15 = arith.constant 0 : index
    %c0_16 = arith.constant 0 : index
    %c0_17 = arith.constant 0 : index
    %15 = vector.load %arg3[%c0_14, %c0_15, %c0_16, %c0_17] : memref<4x3x144x128xbf16, #tpu.memory_space<vmem>>, vector<1x1x144x128xbf16>
    %16 = vector.shape_cast %15 : vector<1x1x144x128xbf16> to vector<144x128xbf16>
    %cst_18 = arith.constant dense<0.000000e+00> : vector<16x128xf32>
    %17 = tpu.matmul %14, %16, %cst_18 {dimension_numbers = #tpu.dot_dimension_numbers<[1], [0], [0], [1], [0, 0, 1, 1], [], []>} : vector<16x144xbf16>, vector<144x128xbf16>, vector<16x128xf32> -> vector<16x128xf32>
    %c1_19 = arith.constant 1 : index
    %c0_20 = arith.constant 0 : index
    %18 = vector.load %arg8[%c1_19, %c0_20] : memref<18x144xf32, #tpu.memory_space<vmem>>, vector<16x144xf32>
    %19 = arith.truncf %18 : vector<16x144xf32> to vector<16x144xbf16>
    %c0_21 = arith.constant 0 : index
    %c1_22 = arith.constant 1 : index
    %c0_23 = arith.constant 0 : index
    %c0_24 = arith.constant 0 : index
    %20 = vector.load %arg3[%c0_21, %c1_22, %c0_23, %c0_24] : memref<4x3x144x128xbf16, #tpu.memory_space<vmem>>, vector<1x1x144x128xbf16>
    %21 = vector.shape_cast %20 : vector<1x1x144x128xbf16> to vector<144x128xbf16>
    %cst_25 = arith.constant dense<0.000000e+00> : vector<16x128xf32>
    %22 = tpu.matmul %19, %21, %cst_25 {dimension_numbers = #tpu.dot_dimension_numbers<[1], [0], [0], [1], [0, 0, 1, 1], [], []>} : vector<16x144xbf16>, vector<144x128xbf16>, vector<16x128xf32> -> vector<16x128xf32>
    %23 = arith.addf %17, %22 : vector<16x128xf32>
    %c2 = arith.constant 2 : index
    %c0_26 = arith.constant 0 : index
    %24 = vector.load %arg8[%c2, %c0_26] : memref<18x144xf32, #tpu.memory_space<vmem>>, vector<16x144xf32>
    %25 = arith.truncf %24 : vector<16x144xf32> to vector<16x144xbf16>
    %c0_27 = arith.constant 0 : index
    %c2_28 = arith.constant 2 : index
    %c0_29 = arith.constant 0 : index
    %c0_30 = arith.constant 0 : index
    %26 = vector.load %arg3[%c0_27, %c2_28, %c0_29, %c0_30] : memref<4x3x144x128xbf16, #tpu.memory_space<vmem>>, vector<1x1x144x128xbf16>
    %27 = vector.shape_cast %26 : vector<1x1x144x128xbf16> to vector<144x128xbf16>
    %cst_31 = arith.constant dense<0.000000e+00> : vector<16x128xf32>
    %28 = tpu.matmul %25, %27, %cst_31 {dimension_numbers = #tpu.dot_dimension_numbers<[1], [0], [0], [1], [0, 0, 1, 1], [], []>} : vector<16x144xbf16>, vector<144x128xbf16>, vector<16x128xf32> -> vector<16x128xf32>
    %29 = arith.addf %23, %28 : vector<16x128xf32>
    %c0_32 = arith.constant 0 : index
    %c0_33 = arith.constant 0 : index
    %30 = vector.load %arg4[%c0_32, %c0_33] : memref<4x128xf32, #tpu.memory_space<vmem>>, vector<1x128xf32>
    %31 = vector.broadcast %30 : vector<1x128xf32> to vector<16x128xf32>
    %32 = arith.addf %29, %31 : vector<16x128xf32>
    %cst_34 = arith.constant 0.000000e+00 : f32
    %33 = vector.broadcast %cst_34 : f32 to vector<16x128xf32>
    %34 = arith.maximumf %32, %33 : vector<16x128xf32>
    %c1_35 = arith.constant 1 : index
    %c8_36 = arith.constant 8 : index
    %35 = vector.load %arg8[%c1_35, %c8_36] : memref<18x144xf32, #tpu.memory_space<vmem>>, vector<16x128xf32>
    tpu.vector_store %arg8[%c1_35, %c8_36], %34 {strides = array<i32>} : memref<18x144xf32, #tpu.memory_space<vmem>>, vector<16x128xf32>,
    %c0_37 = arith.constant 0 : index
    %c0_38 = arith.constant 0 : index
    %36 = vector.load %arg8[%c0_37, %c0_38] : memref<18x144xf32, #tpu.memory_space<vmem>>, vector<16x144xf32>
    %37 = arith.truncf %36 : vector<16x144xf32> to vector<16x144xbf16>
    %c1_39 = arith.constant 1 : index
    %c0_40 = arith.constant 0 : index
    %c0_41 = arith.constant 0 : index
    %c0_42 = arith.constant 0 : index
    %38 = vector.load %arg3[%c1_39, %c0_40, %c0_41, %c0_42] : memref<4x3x144x128xbf16, #tpu.memory_space<vmem>>, vector<1x1x144x128xbf16>
    %39 = vector.shape_cast %38 : vector<1x1x144x128xbf16> to vector<144x128xbf16>
    %cst_43 = arith.constant dense<0.000000e+00> : vector<16x128xf32>
    %40 = tpu.matmul %37, %39, %cst_43 {dimension_numbers = #tpu.dot_dimension_numbers<[1], [0], [0], [1], [0, 0, 1, 1], [], []>} : vector<16x144xbf16>, vector<144x128xbf16>, vector<16x128xf32> -> vector<16x128xf32>
    %c1_44 = arith.constant 1 : index
    %c0_45 = arith.constant 0 : index
    %41 = vector.load %arg8[%c1_44, %c0_45] : memref<18x144xf32, #tpu.memory_space<vmem>>, vector<16x144xf32>
    %42 = arith.truncf %41 : vector<16x144xf32> to vector<16x144xbf16>
    %c1_46 = arith.constant 1 : index
    %c1_47 = arith.constant 1 : index
    %c0_48 = arith.constant 0 : index
    %c0_49 = arith.constant 0 : index
    %43 = vector.load %arg3[%c1_46, %c1_47, %c0_48, %c0_49] : memref<4x3x144x128xbf16, #tpu.memory_space<vmem>>, vector<1x1x144x128xbf16>
    %44 = vector.shape_cast %43 : vector<1x1x144x128xbf16> to vector<144x128xbf16>
    %cst_50 = arith.constant dense<0.000000e+00> : vector<16x128xf32>
    %45 = tpu.matmul %42, %44, %cst_50 {dimension_numbers = #tpu.dot_dimension_numbers<[1], [0], [0], [1], [0, 0, 1, 1], [], []>} : vector<16x144xbf16>, vector<144x128xbf16>, vector<16x128xf32> -> vector<16x128xf32>
    %46 = arith.addf %40, %45 : vector<16x128xf32>
    %c2_51 = arith.constant 2 : index
    %c0_52 = arith.constant 0 : index
    %47 = vector.load %arg8[%c2_51, %c0_52] : memref<18x144xf32, #tpu.memory_space<vmem>>, vector<16x144xf32>
    %48 = arith.truncf %47 : vector<16x144xf32> to vector<16x144xbf16>
    %c1_53 = arith.constant 1 : index
    %c2_54 = arith.constant 2 : index
    %c0_55 = arith.constant 0 : index
    %c0_56 = arith.constant 0 : index
    %49 = vector.load %arg3[%c1_53, %c2_54, %c0_55, %c0_56] : memref<4x3x144x128xbf16, #tpu.memory_space<vmem>>, vector<1x1x144x128xbf16>
    %50 = vector.shape_cast %49 : vector<1x1x144x128xbf16> to vector<144x128xbf16>
    %cst_57 = arith.constant dense<0.000000e+00> : vector<16x128xf32>
    %51 = tpu.matmul %48, %50, %cst_57 {dimension_numbers = #tpu.dot_dimension_numbers<[1], [0], [0], [1], [0, 0, 1, 1], [], []>} : vector<16x144xbf16>, vector<144x128xbf16>, vector<16x128xf32> -> vector<16x128xf32>
    %52 = arith.addf %46, %51 : vector<16x128xf32>
    %c1_58 = arith.constant 1 : index
    %c0_59 = arith.constant 0 : index
    %53 = vector.load %arg4[%c1_58, %c0_59] : memref<4x128xf32, #tpu.memory_space<vmem>>, vector<1x128xf32>
    %54 = vector.broadcast %53 : vector<1x128xf32> to vector<16x128xf32>
    %55 = arith.addf %52, %54 : vector<16x128xf32>
    %56 = arith.addf %55, %9 : vector<16x128xf32>
    %c0_60 = arith.constant 0 : index
    %c0_61 = arith.constant 0 : index
    %c0_62 = arith.constant 0 : index
    %57 = vector.load %arg1[%c0_60, %c0_61, %c0_62] : memref<1x16x128xf32, #tpu.memory_space<vmem>>, vector<1x16x128xf32>
    %58 = vector.shape_cast %57 : vector<1x16x128xf32> to vector<16x128xf32>
    %59 = arith.addf %56, %58 : vector<16x128xf32>
    %cst_63 = arith.constant 0.000000e+00 : f32
    %60 = vector.broadcast %cst_63 : f32 to vector<16x128xf32>
    %61 = arith.maximumf %59, %60 : vector<16x128xf32>
    %c1_64 = arith.constant 1 : index
    %c8_65 = arith.constant 8 : index
    %62 = vector.load %arg8[%c1_64, %c8_65] : memref<18x144xf32, #tpu.memory_space<vmem>>, vector<16x128xf32>
    tpu.vector_store %arg8[%c1_64, %c8_65], %61 {strides = array<i32>} : memref<18x144xf32, #tpu.memory_space<vmem>>, vector<16x128xf32>,
    %c0_66 = arith.constant 0 : index
    %c0_67 = arith.constant 0 : index
    %63 = vector.load %arg8[%c0_66, %c0_67] : memref<18x144xf32, #tpu.memory_space<vmem>>, vector<16x144xf32>
    %64 = arith.truncf %63 : vector<16x144xf32> to vector<16x144xbf16>
    %c2_68 = arith.constant 2 : index
    %c0_69 = arith.constant 0 : index
    %c0_70 = arith.constant 0 : index
    %c0_71 = arith.constant 0 : index
    %65 = vector.load %arg3[%c2_68, %c0_69, %c0_70, %c0_71] : memref<4x3x144x128xbf16, #tpu.memory_space<vmem>>, vector<1x1x144x128xbf16>
    %66 = vector.shape_cast %65 : vector<1x1x144x128xbf16> to vector<144x128xbf16>
    %cst_72 = arith.constant dense<0.000000e+00> : vector<16x128xf32>
    %67 = tpu.matmul %64, %66, %cst_72 {dimension_numbers = #tpu.dot_dimension_numbers<[1], [0], [0], [1], [0, 0, 1, 1], [], []>} : vector<16x144xbf16>, vector<144x128xbf16>, vector<16x128xf32> -> vector<16x128xf32>
    %c1_73 = arith.constant 1 : index
    %c0_74 = arith.constant 0 : index
    %68 = vector.load %arg8[%c1_73, %c0_74] : memref<18x144xf32, #tpu.memory_space<vmem>>, vector<16x144xf32>
    %69 = arith.truncf %68 : vector<16x144xf32> to vector<16x144xbf16>
    %c2_75 = arith.constant 2 : index
    %c1_76 = arith.constant 1 : index
    %c0_77 = arith.constant 0 : index
    %c0_78 = arith.constant 0 : index
    %70 = vector.load %arg3[%c2_75, %c1_76, %c0_77, %c0_78] : memref<4x3x144x128xbf16, #tpu.memory_space<vmem>>, vector<1x1x144x128xbf16>
    %71 = vector.shape_cast %70 : vector<1x1x144x128xbf16> to vector<144x128xbf16>
    %cst_79 = arith.constant dense<0.000000e+00> : vector<16x128xf32>
    %72 = tpu.matmul %69, %71, %cst_79 {dimension_numbers = #tpu.dot_dimension_numbers<[1], [0], [0], [1], [0, 0, 1, 1], [], []>} : vector<16x144xbf16>, vector<144x128xbf16>, vector<16x128xf32> -> vector<16x128xf32>
    %73 = arith.addf %67, %72 : vector<16x128xf32>
    %c2_80 = arith.constant 2 : index
    %c0_81 = arith.constant 0 : index
    %74 = vector.load %arg8[%c2_80, %c0_81] : memref<18x144xf32, #tpu.memory_space<vmem>>, vector<16x144xf32>
    %75 = arith.truncf %74 : vector<16x144xf32> to vector<16x144xbf16>
    %c2_82 = arith.constant 2 : index
    %c2_83 = arith.constant 2 : index
    %c0_84 = arith.constant 0 : index
    %c0_85 = arith.constant 0 : index
    %76 = vector.load %arg3[%c2_82, %c2_83, %c0_84, %c0_85] : memref<4x3x144x128xbf16, #tpu.memory_space<vmem>>, vector<1x1x144x128xbf16>
    %77 = vector.shape_cast %76 : vector<1x1x144x128xbf16> to vector<144x128xbf16>
    %cst_86 = arith.constant dense<0.000000e+00> : vector<16x128xf32>
    %78 = tpu.matmul %75, %77, %cst_86 {dimension_numbers = #tpu.dot_dimension_numbers<[1], [0], [0], [1], [0, 0, 1, 1], [], []>} : vector<16x144xbf16>, vector<144x128xbf16>, vector<16x128xf32> -> vector<16x128xf32>
    %79 = arith.addf %73, %78 : vector<16x128xf32>
    %c2_87 = arith.constant 2 : index
    %c0_88 = arith.constant 0 : index
    %80 = vector.load %arg4[%c2_87, %c0_88] : memref<4x128xf32, #tpu.memory_space<vmem>>, vector<1x128xf32>
    %81 = vector.broadcast %80 : vector<1x128xf32> to vector<16x128xf32>
    %82 = arith.addf %79, %81 : vector<16x128xf32>
    %cst_89 = arith.constant 0.000000e+00 : f32
    %83 = vector.broadcast %cst_89 : f32 to vector<16x128xf32>
    %84 = arith.maximumf %82, %83 : vector<16x128xf32>
    %c1_90 = arith.constant 1 : index
    %c8_91 = arith.constant 8 : index
    %85 = vector.load %arg8[%c1_90, %c8_91] : memref<18x144xf32, #tpu.memory_space<vmem>>, vector<16x128xf32>
    tpu.vector_store %arg8[%c1_90, %c8_91], %84 {strides = array<i32>} : memref<18x144xf32, #tpu.memory_space<vmem>>, vector<16x128xf32>,
    %c0_92 = arith.constant 0 : index
    %c0_93 = arith.constant 0 : index
    %86 = vector.load %arg8[%c0_92, %c0_93] : memref<18x144xf32, #tpu.memory_space<vmem>>, vector<16x144xf32>
    %87 = arith.truncf %86 : vector<16x144xf32> to vector<16x144xbf16>
    %c3 = arith.constant 3 : index
    %c0_94 = arith.constant 0 : index
    %c0_95 = arith.constant 0 : index
    %c0_96 = arith.constant 0 : index
    %88 = vector.load %arg3[%c3, %c0_94, %c0_95, %c0_96] : memref<4x3x144x128xbf16, #tpu.memory_space<vmem>>, vector<1x1x144x128xbf16>
    %89 = vector.shape_cast %88 : vector<1x1x144x128xbf16> to vector<144x128xbf16>
    %cst_97 = arith.constant dense<0.000000e+00> : vector<16x128xf32>
    %90 = tpu.matmul %87, %89, %cst_97 {dimension_numbers = #tpu.dot_dimension_numbers<[1], [0], [0], [1], [0, 0, 1, 1], [], []>} : vector<16x144xbf16>, vector<144x128xbf16>, vector<16x128xf32> -> vector<16x128xf32>
    %c1_98 = arith.constant 1 : index
    %c0_99 = arith.constant 0 : index
    %91 = vector.load %arg8[%c1_98, %c0_99] : memref<18x144xf32, #tpu.memory_space<vmem>>, vector<16x144xf32>
    %92 = arith.truncf %91 : vector<16x144xf32> to vector<16x144xbf16>
    %c3_100 = arith.constant 3 : index
    %c1_101 = arith.constant 1 : index
    %c0_102 = arith.constant 0 : index
    %c0_103 = arith.constant 0 : index
    %93 = vector.load %arg3[%c3_100, %c1_101, %c0_102, %c0_103] : memref<4x3x144x128xbf16, #tpu.memory_space<vmem>>, vector<1x1x144x128xbf16>
    %94 = vector.shape_cast %93 : vector<1x1x144x128xbf16> to vector<144x128xbf16>
    %cst_104 = arith.constant dense<0.000000e+00> : vector<16x128xf32>
    %95 = tpu.matmul %92, %94, %cst_104 {dimension_numbers = #tpu.dot_dimension_numbers<[1], [0], [0], [1], [0, 0, 1, 1], [], []>} : vector<16x144xbf16>, vector<144x128xbf16>, vector<16x128xf32> -> vector<16x128xf32>
    %96 = arith.addf %90, %95 : vector<16x128xf32>
    %c2_105 = arith.constant 2 : index
    %c0_106 = arith.constant 0 : index
    %97 = vector.load %arg8[%c2_105, %c0_106] : memref<18x144xf32, #tpu.memory_space<vmem>>, vector<16x144xf32>
    %98 = arith.truncf %97 : vector<16x144xf32> to vector<16x144xbf16>
    %c3_107 = arith.constant 3 : index
    %c2_108 = arith.constant 2 : index
    %c0_109 = arith.constant 0 : index
    %c0_110 = arith.constant 0 : index
    %99 = vector.load %arg3[%c3_107, %c2_108, %c0_109, %c0_110] : memref<4x3x144x128xbf16, #tpu.memory_space<vmem>>, vector<1x1x144x128xbf16>
    %100 = vector.shape_cast %99 : vector<1x1x144x128xbf16> to vector<144x128xbf16>
    %cst_111 = arith.constant dense<0.000000e+00> : vector<16x128xf32>
    %101 = tpu.matmul %98, %100, %cst_111 {dimension_numbers = #tpu.dot_dimension_numbers<[1], [0], [0], [1], [0, 0, 1, 1], [], []>} : vector<16x144xbf16>, vector<144x128xbf16>, vector<16x128xf32> -> vector<16x128xf32>
    %102 = arith.addf %96, %101 : vector<16x128xf32>
    %c3_112 = arith.constant 3 : index
    %c0_113 = arith.constant 0 : index
    %103 = vector.load %arg4[%c3_112, %c0_113] : memref<4x128xf32, #tpu.memory_space<vmem>>, vector<1x128xf32>
    %104 = vector.broadcast %103 : vector<1x128xf32> to vector<16x128xf32>
    %105 = arith.addf %102, %104 : vector<16x128xf32>
    %106 = arith.addf %105, %59 : vector<16x128xf32>
    %107 = arith.truncf %106 : vector<16x128xf32> to vector<16x128xbf16>
    %c0_114 = arith.constant 0 : index
    %c0_115 = arith.constant 0 : index
    %108 = vector.load %arg6[%c0_114, %c0_115] : memref<128x256xbf16, #tpu.memory_space<vmem>>, vector<128x256xbf16>
    %cst_116 = arith.constant dense<0.000000e+00> : vector<16x256xf32>
    %109 = tpu.matmul %107, %108, %cst_116 {dimension_numbers = #tpu.dot_dimension_numbers<[1], [0], [0], [1], [0, 0, 1, 1], [], []>} : vector<16x128xbf16>, vector<128x256xbf16>, vector<16x256xf32> -> vector<16x256xf32>
    %c0_117 = arith.constant 0 : index
    %c0_118 = arith.constant 0 : index
    %110 = vector.load %arg5[%c0_117, %c0_118] : memref<32x16xbf16, #tpu.memory_space<vmem>>, vector<32x16xbf16>
    %111 = arith.truncf %109 : vector<16x256xf32> to vector<16x256xbf16>
    %cst_119 = arith.constant dense<0.000000e+00> : vector<32x256xf32>
    %112 = tpu.matmul %110, %111, %cst_119 {dimension_numbers = #tpu.dot_dimension_numbers<[1], [0], [0], [1], [0, 0, 1, 1], [], []>} : vector<32x16xbf16>, vector<16x256xbf16>, vector<32x256xf32> -> vector<32x256xf32>
    %c0_120 = arith.constant 0 : index
    %c0_121 = arith.constant 0 : index
    %c0_122 = arith.constant 0 : index
    %113 = vector.load %arg7[%c0_120, %c0_121, %c0_122] : memref<1x32x256xf32, #tpu.memory_space<vmem>>, vector<1x32x256xf32>
    %114 = vector.shape_cast %113 : vector<1x32x256xf32> to vector<32x256xf32>
    %115 = vector.shape_cast %112 : vector<32x256xf32> to vector<1x32x256xf32>
    tpu.vector_store %arg7[%c0_120, %c0_121, %c0_122], %115 {strides = array<i32>} : memref<1x32x256xf32, #tpu.memory_space<vmem>>, vector<1x32x256xf32>,
    return
  }
  func.func @transform_0(%arg0: i32) -> (i32, i32, i32) {
    %c0_i32 = arith.constant 0 : i32
    %c0_i32_0 = arith.constant 0 : i32
    %c0_i32_1 = arith.constant 0 : i32
    return %arg0, %c0_i32, %c0_i32_0 : i32, i32, i32
  }
  func.func @transform_1(%arg0: i32) -> (i32, i32, i32) {
    %c0_i32 = arith.constant 0 : i32
    %c0_i32_0 = arith.constant 0 : i32
    %c0_i32_1 = arith.constant 0 : i32
    return %arg0, %c0_i32, %c0_i32_0 : i32, i32, i32
  }
  func.func @transform_2(%arg0: i32) -> (i32, i32, i32, i32) {
    %c0_i32 = arith.constant 0 : i32
    %c0_i32_0 = arith.constant 0 : i32
    %c0_i32_1 = arith.constant 0 : i32
    %c0_i32_2 = arith.constant 0 : i32
    %c0_i32_3 = arith.constant 0 : i32
    return %c0_i32, %c0_i32_0, %c0_i32_1, %c0_i32_2 : i32, i32, i32, i32
  }
  func.func @transform_3(%arg0: i32) -> (i32, i32) {
    %c0_i32 = arith.constant 0 : i32
    %c0_i32_0 = arith.constant 0 : i32
    %c0_i32_1 = arith.constant 0 : i32
    return %c0_i32, %c0_i32_0 : i32, i32
  }
  func.func @transform_4(%arg0: i32) -> (i32, i32) {
    %c0_i32 = arith.constant 0 : i32
    %c0_i32_0 = arith.constant 0 : i32
    %c0_i32_1 = arith.constant 0 : i32
    return %c0_i32, %c0_i32_0 : i32, i32
  }
  func.func @transform_5(%arg0: i32) -> (i32, i32) {
    %c0_i32 = arith.constant 0 : i32
    %c0_i32_0 = arith.constant 0 : i32
    %c0_i32_1 = arith.constant 0 : i32
    return %c0_i32, %c0_i32_0 : i32, i32
  }
  func.func @transform_6(%arg0: i32) -> (i32, i32, i32) {
    %c0_i32 = arith.constant 0 : i32
    %c0_i32_0 = arith.constant 0 : i32
    %c0_i32_1 = arith.constant 0 : i32
    return %arg0, %c0_i32, %c0_i32_0 : i32, i32, i32
  }
}

</mosaic_0001>

<llo_original>
// kernel: tpu_custom_call.1
$region0: #{tpu_custom_call.1}
  #allocation0 [shape = 'u32[]', space=smem, size = 0x4, offset = 0x4, fixed_abs, tag = 'smem constant byte address 0x4 - core index']
  #allocation1 [shape = 'u32[144,128]{1,0:T(1,128)}', space=vmem, size = 0x12000, scoped, tag = 'internal scratch']
  #allocation2 [shape = 'f32[18,144]{1,0:T(8,128)}', space=vmem, size = 0x6000, scoped, tag = 'scratch operand']
  %s0 = inlined_call_operand.hbm [shape: f32[2,16,128], index: 0, kind: input, shape index: {}]
  %s1 = inlined_call_operand.hbm [shape: f32[2,16,128], index: 1, kind: input, shape index: {}]
  %s2 = inlined_call_operand.hbm [shape: bf16[4,3,144,128], index: 2, kind: input, shape index: {}]
  %s3 = inlined_call_operand.vmem [shape: f32[4,128], index: 3, kind: input, shape index: {}]
  %s4 = inlined_call_operand.vmem [shape: bf16[32,16], index: 4, kind: input, shape index: {}]
  %s5 = inlined_call_operand.hbm [shape: bf16[128,256], index: 5, kind: input, shape index: {}]
  %s6 = inlined_call_operand.hbm [shape: f32[2,32,256], index: 6, kind: output, shape index: {}]
  %s7 = sld [smem:[#allocation0]]
  $region73: #{tpu_custom_call.1} parent=0
    _
  %s9 = ssub.s32 1, %s7
  %s10 = scalar_select 0, %s9, %s7
  $region1: #{tpu_custom_call.1} parent=0
    #allocation3 [shape = 'u8[16384]{0}', space=vmem, size = 0x4000, scoped, tag = 'input window, operand 0']
    #allocation4 [shape = 's32[2]{0}', space=sflag, size = 0x8, scoped, tag = 'scoped memory for tpu_custom_call.1']
    #allocation5 [shape = 's32[2]{0}', space=sflag, size = 0x8, scoped, tag = 'scoped memory for tpu_custom_call.1']
    #allocation6 [shape = 'u8[16384]{0}', space=vmem, size = 0x4000, scoped, tag = 'input window, operand 1']
    #allocation7 [shape = 's32[2]{0}', space=sflag, size = 0x8, scoped, tag = 'scoped memory for tpu_custom_call.1']
    #allocation8 [shape = 'u8[442368]{0}', space=vmem, size = 0x6c000, scoped, tag = 'input window, operand 2, single buffered']
    #allocation9 [shape = 'u8[65536]{0}', space=vmem, size = 0x10000, scoped, tag = 'input window, operand 5, single buffered']
    #allocation10 [shape = 's32[1]{0}', space=sflag, size = 0x4, scoped, tag = 'scoped memory for tpu_custom_call.1']
    #allocation11 [shape = 'u8[65536]{0}', space=vmem, size = 0x10000, scoped, tag = 'output window, operand 0']
    %11 = vsyncpa [#allocation4], 0
    %s12 = scalar_lea.sflag [#allocation4], 1
    %13 = vsyncpa %s12, 0
    %14 = vsyncpa [#allocation7], 0
    %s15 = scalar_lea.sflag [#allocation7], 1
    %16 = vsyncpa %s15, 0
    %17 = vsyncpa [#allocation10], 0
    %18 = vsyncpa [#allocation5], 0
    %s19 = scalar_lea.sflag [#allocation5], 1
    %20 = vsyncpa %s19, 0
    loop: start=0, step=1, limit=4
    $region2: #{tpu_custom_call.1} parent=1 // loop_pre_header
      _
    $region3: #{tpu_custom_call.1} parent=1 // loop_header
      %s22 = sphi 0, %s26
      %p23 = scmp.ge.s32.totalorder %s22, 4
      %s32 = sphi 0, %s34
      %s35 = sphi 0, %s32
      %s36 = sphi 0, %s35
      %s52 = sphi 0, %s36
      %s58 = sphi 0, %s60
      %s61 = sphi 0, %s58
      %s62 = sphi 0, %s61
      %s78 = sphi 0, %s62
      %s82 = sphi 0, %s82
      %s84 = sphi 0, %s82
      %s85 = sphi 0, %s84
      %s99 = sphi 0, %s85
      %s103 = sphi 0, %s103
      %s105 = sphi 0, %s103
      %s106 = sphi 0, %s105
      %s120 = sphi 0, %s106
      %s124 = sphi 0, %s124
      %s126 = sphi 0, %s124
      %s127 = sphi 0, %s126
      %s141 = sphi 0, %s127
      %s145 = sphi 0, %s145
      %s147 = sphi 0, %s145
      %s148 = sphi 0, %s147
      %s162 = sphi 0, %s148
      %s168 = sphi 0, %s170
      %s171 = sphi 0, %s168
      %s172 = sphi 0, %s171
      %s188 = sphi 0, %s172
    $region4: #{tpu_custom_call.1} parent=1 // loop_header_branch
      %25 = sbr.rel (%p23) target = $region8
    $region5: #{tpu_custom_call.1} parent=1 // loop_body
      %s27 = ssub.s32 %s22, 1
      %s28 = ssub.s32 %s22, 2
      %s29 = sadd.s32 %s22, 1
      %s30 = ssub.s32 %s22, %s29
      %p31 = scmp.eq.s32.totalorder %s30, 0
      %s33 = sadd.s32 %s32, 1
      %s34 = scalar_select %p31, %s32, %s33
      %p37 = pneg %p31
      %p38 = scmp.eq.s32.totalorder %s22, 1
      %p39 = por %p37, %p38
      %p40 = scmp.ne.s32.totalorder %s32, %s35
      %p41 = scmp.eq.s32.totalorder %s22, 0
      %p42 = por %p40, %p41
      %p43 = scmp.ne.s32.totalorder %s32, %s35
      %p44 = scmp.eq.s32.totalorder %s27, 1
      %p45 = por %p43, %p44
      %p46 = scmp.ne.s32.totalorder %s35, %s36
      %p47 = scmp.eq.s32.totalorder %s27, 0
      %p48 = por %p46, %p47
      %p49 = scmp.ne.s32.totalorder %s35, %s36
      %p50 = scmp.eq.s32.totalorder %s28, 1
      %p51 = por %p49, %p50
      %p53 = scmp.ne.s32.totalorder %s36, %s52
      %p54 = scmp.eq.s32.totalorder %s28, 0
      %p55 = por %p53, %p54
      %s56 = ssub.s32 %s22, %s29
      %p57 = scmp.eq.s32.totalorder %s56, 0
      %s59 = sadd.s32 %s58, 1
      %s60 = scalar_select %p57, %s58, %s59
      %p63 = pneg %p57
      %p64 = scmp.eq.s32.totalorder %s22, 1
      %p65 = por %p63, %p64
      %p66 = scmp.ne.s32.totalorder %s58, %s61
      %p67 = scmp.eq.s32.totalorder %s22, 0
      %p68 = por %p66, %p67
      %p69 = scmp.ne.s32.totalorder %s58, %s61
      %p70 = scmp.eq.s32.totalorder %s27, 1
      %p71 = por %p69, %p70
      %p72 = scmp.ne.s32.totalorder %s61, %s62
      %p73 = scmp.eq.s32.totalorder %s27, 0
      %p74 = por %p72, %p73
      %p75 = scmp.ne.s32.totalorder %s61, %s62
      %p76 = scmp.eq.s32.totalorder %s28, 1
      %p77 = por %p75, %p76
      %p79 = scmp.ne.s32.totalorder %s62, %s78
      %p80 = scmp.eq.s32.totalorder %s28, 0
      %p81 = por %p79, %p80
      %s83 = sadd.s32 %s82, 1
      %p86 = scmp.eq.s32.totalorder %s22, 1
      %p87 = scmp.ne.s32.totalorder %s82, %s84
      %p88 = scmp.eq.s32.totalorder %s22, 0
      %p89 = por %p87, %p88
      %p90 = scmp.ne.s32.totalorder %s82, %s84
      %p91 = scmp.eq.s32.totalorder %s27, 1
      %p92 = por %p90, %p91
      %p93 = scmp.ne.s32.totalorder %s84, %s85
      %p94 = scmp.eq.s32.totalorder %s27, 0
      %p95 = por %p93, %p94
      %p96 = scmp.ne.s32.totalorder %s84, %s85
      %p97 = scmp.eq.s32.totalorder %s28, 1
      %p98 = por %p96, %p97
      %p100 = scmp.ne.s32.totalorder %s85, %s99
      %p101 = scmp.eq.s32.totalorder %s28, 0
      %p102 = por %p100, %p101
      %s104 = sadd.s32 %s103, 1
      %p107 = scmp.eq.s32.totalorder %s22, 1
      %p108 = scmp.ne.s32.totalorder %s103, %s105
      %p109 = scmp.eq.s32.totalorder %s22, 0
      %p110 = por %p108, %p109
      %p111 = scmp.ne.s32.totalorder %s103, %s105
      %p112 = scmp.eq.s32.totalorder %s27, 1
      %p113 = por %p111, %p112
      %p114 = scmp.ne.s32.totalorder %s105, %s106
      %p115 = scmp.eq.s32.totalorder %s27, 0
      %p116 = por %p114, %p115
      %p117 = scmp.ne.s32.totalorder %s105, %s106
      %p118 = scmp.eq.s32.totalorder %s28, 1
      %p119 = por %p117, %p118
      %p121 = scmp.ne.s32.totalorder %s106, %s120
      %p122 = scmp.eq.s32.totalorder %s28, 0
      %p123 = por %p121, %p122
      %s125 = sadd.s32 %s124, 1
      %p128 = scmp.eq.s32.totalorder %s22, 1
      %p129 = scmp.ne.s32.totalorder %s124, %s126
      %p130 = scmp.eq.s32.totalorder %s22, 0
      %p131 = por %p129, %p130
      %p132 = scmp.ne.s32.totalorder %s124, %s126
      %p133 = scmp.eq.s32.totalorder %s27, 1
      %p134 = por %p132, %p133
      %p135 = scmp.ne.s32.totalorder %s126, %s127
      %p136 = scmp.eq.s32.totalorder %s27, 0
      %p137 = por %p135, %p136
      %p138 = scmp.ne.s32.totalorder %s126, %s127
      %p139 = scmp.eq.s32.totalorder %s28, 1
      %p140 = por %p138, %p139
      %p142 = scmp.ne.s32.totalorder %s127, %s141
      %p143 = scmp.eq.s32.totalorder %s28, 0
      %p144 = por %p142, %p143
      %s146 = sadd.s32 %s145, 1
      %p149 = scmp.eq.s32.totalorder %s22, 1
      %p150 = scmp.ne.s32.totalorder %s145, %s147
      %p151 = scmp.eq.s32.totalorder %s22, 0
      %p152 = por %p150, %p151
      %p153 = scmp.ne.s32.totalorder %s145, %s147
      %p154 = scmp.eq.s32.totalorder %s27, 1
      %p155 = por %p153, %p154
      %p156 = scmp.ne.s32.totalorder %s147, %s148
      %p157 = scmp.eq.s32.totalorder %s27, 0
      %p158 = por %p156, %p157
      %p159 = scmp.ne.s32.totalorder %s147, %s148
      %p160 = scmp.eq.s32.totalorder %s28, 1
      %p161 = por %p159, %p160
      %p163 = scmp.ne.s32.totalorder %s148, %s162
      %p164 = scmp.eq.s32.totalorder %s28, 0
      %p165 = por %p163, %p164
      %s166 = ssub.s32 %s22, %s29
      %p167 = scmp.eq.s32.totalorder %s166, 0
      %s169 = sadd.s32 %s168, 1
      %s170 = scalar_select %p167, %s168, %s169
      %p173 = pneg %p167
      %p174 = scmp.eq.s32.totalorder %s22, 1
      %p175 = por %p173, %p174
      %p176 = scmp.ne.s32.totalorder %s168, %s171
      %p177 = scmp.eq.s32.totalorder %s22, 0
      %p178 = por %p176, %p177
      %p179 = scmp.ne.s32.totalorder %s168, %s171
      %p180 = scmp.eq.s32.totalorder %s27, 1
      %p181 = por %p179, %p180
      %p182 = scmp.ne.s32.totalorder %s171, %s172
      %p183 = scmp.eq.s32.totalorder %s27, 0
      %p184 = por %p182, %p183
      %p185 = scmp.ne.s32.totalorder %s171, %s172
      %p186 = scmp.eq.s32.totalorder %s28, 1
      %p187 = por %p185, %p186
      %p189 = scmp.ne.s32.totalorder %s172, %s188
      %p190 = scmp.eq.s32.totalorder %s28, 0
      %p191 = por %p189, %p190
      %p192 = scmp.le.s32.totalorder 1, %s22
      %p193 = scmp.lt.s32.totalorder %s22, 3
      %p194 = pnand %p192, %p193
      %p195 = pneg %p194
      // Predicated region
      $region9: #{tpu_custom_call.1} parent=5 // pred_check
        _
      $region10: #{tpu_custom_call.1} parent=5 // pred_check_branch
        %197 = sbr.rel (%p194) target = $region12
      $region11: #{tpu_custom_call.1} parent=5 // pred_region
        %s198 = ssub.s32 %s22, 1
        // Predicated region
        $region13: #{tpu_custom_call.1} parent=11 // pred_check
          %p199 = pneg %p95
        $region14: #{tpu_custom_call.1} parent=11 // pred_check_branch
          %201 = sbr.rel (%p199) target = $region16
        $region15: #{tpu_custom_call.1} parent=11 // pred_region
          %s203 = ssub.s32 13824, 13824
          %204 = vsyncadd [#allocation7], %s203
          %s205 = sshll.u32 [#allocation8], 4
          %s206 = int_to_ptr.vmem [resolvable:$true] %s205
          %211 = dma.hbm_to_vmem [thread:$0]  %s2, 13824, %s206, [#allocation7], 64, 64, 4
        $region16: #{tpu_custom_call.1} parent=11 // pred_fallthru
          _
        // Predicated region
        $region17: #{tpu_custom_call.1} parent=11 // pred_check
          %p212 = pneg %p116
        $region18: #{tpu_custom_call.1} parent=11 // pred_check_branch
          %214 = sbr.rel (%p212) target = $region20
        $region19: #{tpu_custom_call.1} parent=11 // pred_region
          _
        $region20: #{tpu_custom_call.1} parent=11 // pred_fallthru
          _
        // Predicated region
        $region21: #{tpu_custom_call.1} parent=11 // pred_check
          %p215 = pneg %p137
        $region22: #{tpu_custom_call.1} parent=11 // pred_check_branch
          %217 = sbr.rel (%p215) target = $region24
        $region23: #{tpu_custom_call.1} parent=11 // pred_region
          _
        $region24: #{tpu_custom_call.1} parent=11 // pred_fallthru
          _
        // Predicated region
        $region25: #{tpu_custom_call.1} parent=11 // pred_check
          %p218 = pneg %p158
        $region26: #{tpu_custom_call.1} parent=11 // pred_check_branch
          %220 = sbr.rel (%p218) target = $region28
        $region27: #{tpu_custom_call.1} parent=11 // pred_region
          %s222 = ssub.s32 2048, 2048
          %223 = vsyncadd [#allocation10], %s222
          %s224 = sshll.u32 [#allocation9], 4
          %s225 = int_to_ptr.vmem [resolvable:$true] %s224
          %230 = dma.hbm_to_vmem [thread:$0]  %s5, 2048, %s225, [#allocation10], 128, 128, 8
        $region28: #{tpu_custom_call.1} parent=11 // pred_fallthru
          _
      $region12: #{tpu_custom_call.1} parent=5 // pred_fallthru
        _
      %p231 = scmp.lt.s32.totalorder %s22, 2
      // Predicated region
      $region29: #{tpu_custom_call.1} parent=5 // pred_check
        %p232 = pneg %p231
      $region30: #{tpu_custom_call.1} parent=5 // pred_check_branch
        %234 = sbr.rel (%p232) target = $region32
      $region31: #{tpu_custom_call.1} parent=5 // pred_region
        // Predicated region
        $region33: #{tpu_custom_call.1} parent=31 // pred_check
          %p235 = pneg %p42
        $region34: #{tpu_custom_call.1} parent=31 // pred_check_branch
          %237 = sbr.rel (%p235) target = $region36
        $region35: #{tpu_custom_call.1} parent=31 // pred_region
          %s238 = sand.u32 %s32, 1
          %s239 = scalar_lea.sflag [#allocation4], %s238
          %s240 = sand.u32 %s32, 1
          %s241 = smul.addr %s240, 16
          %s242 = scalar_lea.vmem [#allocation3], %s241
          %s244 = ssub.s32 256, 256
          %245 = vsyncadd %s239, %s244
          %s246 = smul.addr %s22, 2
          %s247 = smul.addr %s246, 128
          %s248 = scalar_lea.hbm %s0, %s247
          %s249 = sshll.u32 %s242, 4
          %s250 = int_to_ptr.vmem [resolvable:$true] %s249
          %255 = dma.hbm_to_vmem [thread:$0]  %s248, 256, %s250, %s239, 128, 128, 8
        $region36: #{tpu_custom_call.1} parent=31 // pred_fallthru
          _
        // Predicated region
        $region37: #{tpu_custom_call.1} parent=31 // pred_check
          %p256 = pneg %p68
        $region38: #{tpu_custom_call.1} parent=31 // pred_check_branch
          %258 = sbr.rel (%p256) target = $region40
        $region39: #{tpu_custom_call.1} parent=31 // pred_region
          %s259 = sand.u32 %s22, 1
          %s260 = scalar_lea.sflag [#allocation7], %s259
          %s261 = sand.u32 %s58, 1
          %s262 = smul.addr %s261, 16
          %s263 = scalar_lea.vmem [#allocation6], %s262
          %s265 = ssub.s32 256, 256
          %266 = vsyncadd %s260, %s265
          %s267 = smul.addr %s22, 2
          %s268 = smul.addr %s267, 128
          %s269 = scalar_lea.hbm %s1, %s268
          %s270 = sshll.u32 %s263, 4
          %s271 = int_to_ptr.vmem [resolvable:$true] %s270
          %276 = dma.hbm_to_vmem [thread:$0]  %s269, 256, %s271, %s260, 128, 128, 8
        $region40: #{tpu_custom_call.1} parent=31 // pred_fallthru
          _
      $region32: #{tpu_custom_call.1} parent=5 // pred_fallthru
        _
      %p277 = scmp.le.s32.totalorder 1, %s22
      %p278 = scmp.lt.s32.totalorder %s22, 3
      %p279 = pnand %p277, %p278
      %p280 = pneg %p279
      // Predicated region
      $region41: #{tpu_custom_call.1} parent=5 // pred_check
        _
      $region42: #{tpu_custom_call.1} parent=5 // pred_check_branch
        %282 = sbr.rel (%p279) target = $region44
      $region43: #{tpu_custom_call.1} parent=5 // pred_region
        %s283 = ssub.s32 %s22, 1
        %s284 = sand.u32 %s35, 1
        %s285 = scalar_lea.sflag [#allocation4], %s284
        %s286 = sand.u32 %s35, 1
        %s287 = smul.addr %s286, 16
        %s288 = scalar_lea.vmem [#allocation3], %s287
        // Predicated region
        $region45: #{tpu_custom_call.1} parent=43 // pred_check
          %p289 = pneg %p48
        $region46: #{tpu_custom_call.1} parent=43 // pred_check_branch
          %291 = sbr.rel (%p289) target = $region48
        $region47: #{tpu_custom_call.1} parent=43 // pred_region
          %292 = dma.done %s285, 256
        $region48: #{tpu_custom_call.1} parent=43 // pred_fallthru
          _
        %s293 = sand.u32 %s27, 1
        %s294 = scalar_lea.sflag [#allocation7], %s293
        %s295 = sand.u32 %s61, 1
        %s296 = smul.addr %s295, 16
        %s297 = scalar_lea.vmem [#allocation6], %s296
        // Predicated region
        $region49: #{tpu_custom_call.1} parent=43 // pred_check
          %p298 = pneg %p74
        $region50: #{tpu_custom_call.1} parent=43 // pred_check_branch
          %300 = sbr.rel (%p298) target = $region52
        $region51: #{tpu_custom_call.1} parent=43 // pred_region
          %301 = dma.done %s294, 256
        $region52: #{tpu_custom_call.1} parent=43 // pred_fallthru
          _
        // Predicated region
        $region53: #{tpu_custom_call.1} parent=43 // pred_check
          %p302 = pneg %p95
        $region54: #{tpu_custom_call.1} parent=43 // pred_check_branch
          %304 = sbr.rel (%p302) target = $region56
        $region55: #{tpu_custom_call.1} parent=43 // pred_region
          %305 = dma.done [#allocation7], 13824
        $region56: #{tpu_custom_call.1} parent=43 // pred_fallthru
          _
        // Predicated region
        $region57: #{tpu_custom_call.1} parent=43 // pred_check
          %p306 = pneg %p158
        $region58: #{tpu_custom_call.1} parent=43 // pred_check_branch
          %308 = sbr.rel (%p306) target = $region60
        $region59: #{tpu_custom_call.1} parent=43 // pred_region
          %309 = dma.done [#allocation10], 2048
        $region60: #{tpu_custom_call.1} parent=43 // pred_fallthru
          _
        %s310 = sand.u32 %s35, 1
        %s311 = scalar_lea.sflag [#allocation4], %s310
        %s312 = sand.u32 %s35, 1
        %s313 = smul.addr %s312, 16
        %s314 = scalar_lea.vmem [#allocation3], %s313
        %p315 = pneg %p48
        %p316 = pneg %p45
        %s317 = sand.u32 %s27, 1
        %s318 = scalar_lea.sflag [#allocation7], %s317
        %s319 = sand.u32 %s61, 1
        %s320 = smul.addr %s319, 16
        %s321 = scalar_lea.vmem [#allocation6], %s320
        %p322 = pneg %p74
        %p323 = pneg %p71
        %p324 = pneg %p95
        %p325 = pneg %p92
        %p326 = pneg %p116
        %p327 = pneg %p113
        %p328 = pneg %p137
        %p329 = pneg %p134
        %p330 = pneg %p158
        %p331 = pneg %p155
        %p332 = pneg %p184
        %p333 = pneg %p181
        %s334 = sand.u32 %s171, 1
        %s335 = scalar_lea.sflag [#allocation5], %s334
        %s336 = sand.u32 %s171, 1
        %s337 = smul.addr %s336, 64
        %s338 = scalar_lea.vmem [#allocation11], %s337
        %v340 = vlaneseq
        %vm341 = vcmp.ge.s32.totalorder %v340, 0
        %vm342 = vcmp.lt.s32.totalorder %v340, 144
        %vm343 = vmand %vm341, %vm342
        %344 = vst.msk [vmem:[#allocation2] ss:$8 sm:$0x3] %vm343, 0.0
        %345 = vst.msk [vmem:[#allocation2] ss:$8 sm:$0x0] %vm343, 0.0
        %s346 = scalar_lea.vmem [#allocation2], 33
        %347 = vst.msk [vmem:[%s346] ss:$8 sm:$0x3] %vm343, 0.0
        %348 = vst.msk [vmem:[%s346] ss:$8 sm:$0x0] %vm343, 0.0
        %vm349 = vcmask 64512
        %350 = vst.msk [vmem:[#allocation2] sm:$0xff] %vm349, 0.0
        %351 = vst.msk [vmem:[#allocation2 + $0x10] sm:$0xff] %vm349, 0.0
        %vm352 = vcmask 58368
        %353 = vst.msk [vmem:[#allocation2 + $0x20] sm:$0x3] %vm352, 0.0
        %vm354 = vcmask 130112
        %355 = vst.msk [vmem:[#allocation2 + $0x8] sm:$0xff] %vm354, 0.0
        %356 = vst.msk [vmem:[#allocation2 + $0x18] sm:$0xff] %vm354, 0.0
        %vm357 = vcmask 123968
        %358 = vst.msk [vmem:[#allocation2 + $0x28] sm:$0x3] %vm357, 0.0
        %v359 = vld [vmem:[%s297] sm:$0xff]
        %v360 = vld [vmem:[%s297 + $0x8] sm:$0xff]
        %v361 = vmax.f32 %v359, 0.0
        %v362 = vmax.f32 %v360, 0.0
        %vm365 = vcmask 1040384
        %v366 = vrot.slane %v361, 7
        %v367 = vrot.slane %v362, 7
        %v368 = vsel %vm365, %v366, %v367
        %369 = vrot.lane.b32.xlu0 %v366, 8
        %v370 = vpop.permute.xlu0 %369
        %371 = vrot.lane.b32.xlu0 %v368, 8
        %v372 = vpop.permute.xlu0 %371
        %373 = vrot.lane.b32.xlu0 %v367, 8
        %v374 = vpop.permute.xlu0 %373
        %vm378 = vcmask 1047617
        %379 = vst.msk [vmem:[#allocation2] sm:$0xfe] %vm378, %v370
        %vm380 = vcmask 64513
        %381 = vst.msk [vmem:[#allocation2 + $0x8] sm:$0xfe] %vm380, %v370
        %vm382 = vcmask 1047616
        %383 = vst.msk [vmem:[#allocation2 + $0x10] sm:$0xff] %vm382, %v372
        %384 = vst.msk [vmem:[#allocation2 + $0x18] sm:$0xff] %vm349, %v372
        %vm385 = vcmask 1040448
        %386 = vst.msk [vmem:[#allocation2 + $0x20] sm:$0x1] %vm385, %v374
        %vm387 = vcmask 57344
        %388 = vst.msk [vmem:[#allocation2 + $0x28] sm:$0x1] %vm387, %v374
        %v389 = vld [vmem:[#allocation2] sm:$0xff]
        %v390 = vld [vmem:[#allocation2 + $0x8] sm:$0xff]
        %v391 = vld [vmem:[#allocation2 + $0x10] sm:$0xff]
        %v392 = vld [vmem:[#allocation2 + $0x18] sm:$0xff]
        %v393 = vpack.c.bf16 %v391, %v389
        %v394 = vpack.c.bf16 %v392, %v390
        %v395 = vld [vmem:[#allocation8] sm:$0xf]
        %v396 = vld [vmem:[#allocation8 + $0x4] sm:$0xf]
        %v397 = vld [vmem:[#allocation8 + $0x8] sm:$0xf]
        %v398 = vld [vmem:[#allocation8 + $0xc] sm:$0xf]
        %v399 = vld [vmem:[#allocation8 + $0x10] sm:$0xf]
        %v400 = vld [vmem:[#allocation8 + $0x14] sm:$0xf]
        %v401 = vld [vmem:[#allocation8 + $0x18] sm:$0xf]
        %v402 = vld [vmem:[#allocation8 + $0x1c] sm:$0xf]
        %v403 = vld [vmem:[#allocation8 + $0x20] sm:$0xf]
        %v404 = vld [vmem:[#allocation8 + $0x24] sm:$0xf]
        %v405 = vld [vmem:[#allocation8 + $0x28] sm:$0xf]
        %v406 = vld [vmem:[#allocation8 + $0x2c] sm:$0xf]
        %v407 = vld [vmem:[#allocation8 + $0x30] sm:$0xf]
        %v408 = vld [vmem:[#allocation8 + $0x34] sm:$0xf]
        %v409 = vld [vmem:[#allocation8 + $0x38] sm:$0xf]
        %v410 = vld [vmem:[#allocation8 + $0x3c] sm:$0xf]
        %v411 = vld [vmem:[#allocation8 + $0x40] sm:$0xf]
        %v412 = vld [vmem:[#allocation8 + $0x44] sm:$0xf]
        %v413 = vld [vmem:[#allocation2] sm:$0xfe]
        %v414 = vld [vmem:[#allocation2 + $0x8] sm:$0xfe]
        %v415 = vld [vmem:[#allocation2 + $0x20] sm:$0x1]
        %v416 = vld [vmem:[#allocation2 + $0x28] sm:$0x1]
        %v417 = vpack.c.bf16 %v391, %v413
        %v418 = vpack.c.bf16 %v392, %v414
        %v419 = vpack.c.bf16 %v415, %v415
        %v420 = vpack.c.bf16 %v416, %v416
        %s421 = scalar_lea.vmem [#allocation8], 72
        %v422 = vld [vmem:[%s421] sm:$0xf]
        %v423 = vld [vmem:[%s421 + $0x4] sm:$0xf]
        %v424 = vld [vmem:[%s421 + $0x8] sm:$0xf]
        %v425 = vld [vmem:[%s421 + $0xc] sm:$0xf]
        %v426 = vld [vmem:[%s421 + $0x10] sm:$0xf]
        %v427 = vld [vmem:[%s421 + $0x14] sm:$0xf]
        %v428 = vld [vmem:[%s421 + $0x18] sm:$0xf]
        %v429 = vld [vmem:[%s421 + $0x1c] sm:$0xf]
        %v430 = vld [vmem:[%s421 + $0x20] sm:$0xf]
        %v431 = vld [vmem:[%s421 + $0x24] sm:$0xf]
        %v432 = vld [vmem:[%s421 + $0x28] sm:$0xf]
        %v433 = vld [vmem:[%s421 + $0x2c] sm:$0xf]
        %v434 = vld [vmem:[%s421 + $0x30] sm:$0xf]
        %v435 = vld [vmem:[%s421 + $0x34] sm:$0xf]
        %v436 = vld [vmem:[%s421 + $0x38] sm:$0xf]
        %v437 = vld [vmem:[%s421 + $0x3c] sm:$0xf]
        %v438 = vld [vmem:[%s421 + $0x40] sm:$0xf]
        %v439 = vld [vmem:[%s421 + $0x44] sm:$0xf]
        %vm440 = vsmask.f32 7424
        %v442 = vshrl.u32 %v417, 16
        %v444 = vshll.u32 %v417, 16
        %v446 = vrot.slane %v444, 1
        %v447 = vor.u32 %v442, %v446
        %v449 = vshll.u32 %v419, 16
        %v451 = vrot.slane %v449, 1
        %v452 = vsel %vm440, %v447, %v451
        %v454 = vshrl.u32 %v418, 16
        %v456 = vshll.u32 %v418, 16
        %v458 = vrot.slane %v456, 1
        %v459 = vor.u32 %v454, %v458
        %v461 = vshll.u32 %v420, 16
        %v463 = vrot.slane %v461, 1
        %v464 = vsel %vm440, %v459, %v463
        %v484 = vunpack.c.l.b16 %v422
        %v485 = vunpack.c.l.b16 %v423
        %v486 = vunpack.c.l.b16 %v424
        %v487 = vunpack.c.l.b16 %v425
        %v488 = vunpack.c.l.b16 %v426
        %v489 = vunpack.c.l.b16 %v427
        %v490 = vunpack.c.l.b16 %v428
        %v491 = vunpack.c.l.b16 %v429
        %v492 = vunpack.c.l.b16 %v430
        %v493 = vunpack.c.l.b16 %v431
        %v494 = vunpack.c.l.b16 %v432
        %v495 = vunpack.c.l.b16 %v433
        %v496 = vunpack.c.l.b16 %v434
        %v497 = vunpack.c.l.b16 %v435
        %v498 = vunpack.c.l.b16 %v436
        %v499 = vunpack.c.l.b16 %v437
        %v500 = vunpack.c.l.b16 %v438
        %v501 = vunpack.c.l.b16 %v439
        %v502 = vpack.c.b16 %v485, %v484
        %v503 = vpack.c.b16 %v487, %v486
        %v504 = vpack.c.b16 %v489, %v488
        %v505 = vpack.c.b16 %v491, %v490
        %v506 = vpack.c.b16 %v493, %v492
        %v507 = vpack.c.b16 %v495, %v494
        %v508 = vpack.c.b16 %v497, %v496
        %v509 = vpack.c.b16 %v499, %v498
        %v510 = vpack.c.b16 %v501, %v500
        %vm520 = vcmask 130048
        %v522 = vsel %vm520, %v464, 0
        %524 = vmatprep.subr.bf16.mxu0 0
        %525 = vmatpush1.bf16.msra.mxu0 %v502
        %526 = vmatprep.subr.bf16.mxu0 0
        %527 = vmatpush1.bf16.msra.mxu0 %v503
        %528 = vmatprep.subr.bf16.mxu0 0
        %529 = vmatpush1.bf16.msra.mxu0 %v504
        %530 = vmatprep.subr.bf16.mxu0 0
        %531 = vmatpush1.bf16.msra.mxu0 %v505
        %532 = vmatprep.subr.bf16.mxu0 0
        %533 = vmatpush1.bf16.msra.mxu0 %v506
        %534 = vmatprep.subr.bf16.mxu0 0
        %535 = vmatpush1.bf16.msra.mxu0 %v507
        %536 = vmatprep.subr.bf16.mxu0 0
        %537 = vmatpush1.bf16.msra.mxu0 %v508
        %538 = vmatprep.subr.bf16.mxu0 0
        %539 = vmatpush1.bf16.msra.mxu0 %v509
        %540 = vmatprep.subr.bf16.mxu0 0
        %541 = vmatpush1.bf16.msra.mxu0 %v510
        %542 = vmatprep.subr.bf16.mxu0 0
        %543 = vmatpush1.bf16.msra.mxu0 0
        %544 = vmatprep.subr.bf16.mxu0 0
        %545 = vmatpush1.bf16.msra.mxu0 0
        %546 = vmatprep.subr.bf16.mxu0 0
        %547 = vmatpush1.bf16.msra.mxu0 0
        %548 = vmatprep.subr.bf16.mxu0 0
        %549 = vmatpush1.bf16.msra.mxu0 0
        %550 = vmatprep.subr.bf16.mxu0 0
        %551 = vmatpush1.bf16.msra.mxu0 0
        %552 = vmatprep.subr.bf16.mxu0 0
        %553 = vmatpush1.bf16.msra.mxu0 0
        %554 = vmatprep.subr.bf16.mxu0 0
        %555 = vmatpush1.bf16.msra.mxu0 0
        %556 = vmatprep.mubr.bf16.mxu0 %v522
        %557 = vmatmul.mubr.bf16.gmra.mrb[0].mxu0 %v452
        %v558 = vpop.f32.mrb[0].mxu0
        %v559 = vadd.f32 0.0, %v558
        %v560 = vpop.f32.mrb[0].mxu0
        %v561 = vpop.f32.mrb[0].mxu0
        %v562 = vadd.f32 0.0, %v561
        %v563 = vpop.f32.mrb[0].mxu0
        %564 = vdwg.mxu0
        %v583 = vunpack.c.l.b16 %v395
        %v584 = vunpack.c.l.b16 %v396
        %v585 = vunpack.c.l.b16 %v397
        %v586 = vunpack.c.l.b16 %v398
        %v587 = vunpack.c.l.b16 %v399
        %v588 = vunpack.c.l.b16 %v400
        %v589 = vunpack.c.l.b16 %v401
        %v590 = vunpack.c.l.b16 %v402
        %v591 = vunpack.c.l.b16 %v403
        %v592 = vunpack.c.l.b16 %v404
        %v593 = vunpack.c.l.b16 %v405
        %v594 = vunpack.c.l.b16 %v406
        %v595 = vunpack.c.l.b16 %v407
        %v596 = vunpack.c.l.b16 %v408
        %v597 = vunpack.c.l.b16 %v409
        %v598 = vunpack.c.l.b16 %v410
        %v599 = vunpack.c.l.b16 %v411
        %v600 = vunpack.c.l.b16 %v412
        %v601 = vpack.c.b16 %v584, %v583
        %v602 = vpack.c.b16 %v586, %v585
        %v603 = vpack.c.b16 %v588, %v587
        %v604 = vpack.c.b16 %v590, %v589
        %v605 = vpack.c.b16 %v592, %v591
        %v606 = vpack.c.b16 %v594, %v593
        %v607 = vpack.c.b16 %v596, %v595
        %v608 = vpack.c.b16 %v598, %v597
        %v609 = vpack.c.b16 %v600, %v599
        %v620 = vsel %vm520, %v394, 0
        %622 = vmatprep.subr.bf16.mxu0 0
        %623 = vmatpush1.bf16.msra.mxu0 %v601
        %624 = vmatprep.subr.bf16.mxu0 0
        %625 = vmatpush1.bf16.msra.mxu0 %v602
        %626 = vmatprep.subr.bf16.mxu0 0
        %627 = vmatpush1.bf16.msra.mxu0 %v603
        %628 = vmatprep.subr.bf16.mxu0 0
        %629 = vmatpush1.bf16.msra.mxu0 %v604
        %630 = vmatprep.subr.bf16.mxu0 0
        %631 = vmatpush1.bf16.msra.mxu0 %v605
        %632 = vmatprep.subr.bf16.mxu0 0
        %633 = vmatpush1.bf16.msra.mxu0 %v606
        %634 = vmatprep.subr.bf16.mxu0 0
        %635 = vmatpush1.bf16.msra.mxu0 %v607
        %636 = vmatprep.subr.bf16.mxu0 0
        %637 = vmatpush1.bf16.msra.mxu0 %v608
        %638 = vmatprep.subr.bf16.mxu0 0
        %639 = vmatpush1.bf16.msra.mxu0 %v609
        %640 = vmatprep.subr.bf16.mxu0 0
        %641 = vmatpush1.bf16.msra.mxu0 0
        %642 = vmatprep.subr.bf16.mxu0 0
        %643 = vmatpush1.bf16.msra.mxu0 0
        %644 = vmatprep.subr.bf16.mxu0 0
        %645 = vmatpush1.bf16.msra.mxu0 0
        %646 = vmatprep.subr.bf16.mxu0 0
        %647 = vmatpush1.bf16.msra.mxu0 0
        %648 = vmatprep.subr.bf16.mxu0 0
        %649 = vmatpush1.bf16.msra.mxu0 0
        %650 = vmatprep.subr.bf16.mxu0 0
        %651 = vmatpush1.bf16.msra.mxu0 0
        %652 = vmatprep.subr.bf16.mxu0 0
        %653 = vmatpush1.bf16.msra.mxu0 0
        %654 = vmatprep.mubr.bf16.mxu0 %v620
        %655 = vmatmul.mubr.bf16.gmra.mrb[0].mxu0 %v393
        %v656 = vpop.f32.mrb[0].mxu0
        %v657 = vadd.f32 %v559, %v656
        %v658 = vpop.f32.mrb[0].mxu0
        %v659 = vpop.f32.mrb[0].mxu0
        %v660 = vadd.f32 %v562, %v659
        %v661 = vpop.f32.mrb[0].mxu0
        %662 = vdwg.mxu0
        %v663 = vld [vmem:[#allocation2] sm:$0xfc]
        %v664 = vld [vmem:[#allocation2 + $0x8] sm:$0xfc]
        %v665 = vld [vmem:[#allocation2 + $0x20] sm:$0x3]
        %v666 = vld [vmem:[#allocation2 + $0x28] sm:$0x3]
        %v667 = vpack.c.bf16 %v391, %v663
        %v668 = vpack.c.bf16 %v392, %v664
        %v669 = vpack.c.bf16 %v665, %v665
        %v670 = vpack.c.bf16 %v666, %v666
        %s671 = scalar_lea.vmem [#allocation8], 144
        %v672 = vld [vmem:[%s671] sm:$0xf]
        %v673 = vld [vmem:[%s671 + $0x4] sm:$0xf]
        %v674 = vld [vmem:[%s671 + $0x8] sm:$0xf]
        %v675 = vld [vmem:[%s671 + $0xc] sm:$0xf]
        %v676 = vld [vmem:[%s671 + $0x10] sm:$0xf]
        %v677 = vld [vmem:[%s671 + $0x14] sm:$0xf]
        %v678 = vld [vmem:[%s671 + $0x18] sm:$0xf]
        %v679 = vld [vmem:[%s671 + $0x1c] sm:$0xf]
        %v680 = vld [vmem:[%s671 + $0x20] sm:$0xf]
        %v681 = vld [vmem:[%s671 + $0x24] sm:$0xf]
        %v682 = vld [vmem:[%s671 + $0x28] sm:$0xf]
        %v683 = vld [vmem:[%s671 + $0x2c] sm:$0xf]
        %v684 = vld [vmem:[%s671 + $0x30] sm:$0xf]
        %v685 = vld [vmem:[%s671 + $0x34] sm:$0xf]
        %v686 = vld [vmem:[%s671 + $0x38] sm:$0xf]
        %v687 = vld [vmem:[%s671 + $0x3c] sm:$0xf]
        %v688 = vld [vmem:[%s671 + $0x40] sm:$0xf]
        %v689 = vld [vmem:[%s671 + $0x44] sm:$0xf]
        %vm694 = vcmask 1046528
        %v695 = vrot.slane %v667, 1
        %v696 = vrot.slane %v669, 1
        %v697 = vsel %vm694, %v695, %v696
        %v698 = vrot.slane %v668, 1
        %v699 = vrot.slane %v670, 1
        %v700 = vsel %vm694, %v698, %v699
        %v720 = vunpack.c.l.b16 %v672
        %v721 = vunpack.c.l.b16 %v673
        %v722 = vunpack.c.l.b16 %v674
        %v723 = vunpack.c.l.b16 %v675
        %v724 = vunpack.c.l.b16 %v676
        %v725 = vunpack.c.l.b16 %v677
        %v726 = vunpack.c.l.b16 %v678
        %v727 = vunpack.c.l.b16 %v679
        %v728 = vunpack.c.l.b16 %v680
        %v729 = vunpack.c.l.b16 %v681
        %v730 = vunpack.c.l.b16 %v682
        %v731 = vunpack.c.l.b16 %v683
        %v732 = vunpack.c.l.b16 %v684
        %v733 = vunpack.c.l.b16 %v685
        %v734 = vunpack.c.l.b16 %v686
        %v735 = vunpack.c.l.b16 %v687
        %v736 = vunpack.c.l.b16 %v688
        %v737 = vunpack.c.l.b16 %v689
        %v738 = vpack.c.b16 %v721, %v720
        %v739 = vpack.c.b16 %v723, %v722
        %v740 = vpack.c.b16 %v725, %v724
        %v741 = vpack.c.b16 %v727, %v726
        %v742 = vpack.c.b16 %v729, %v728
        %v743 = vpack.c.b16 %v731, %v730
        %v744 = vpack.c.b16 %v733, %v732
        %v745 = vpack.c.b16 %v735, %v734
        %v746 = vpack.c.b16 %v737, %v736
        %v757 = vsel %vm520, %v700, 0
        %759 = vmatprep.subr.bf16.mxu0 0
        %760 = vmatpush1.bf16.msra.mxu0 %v738
        %761 = vmatprep.subr.bf16.mxu0 0
        %762 = vmatpush1.bf16.msra.mxu0 %v739
        %763 = vmatprep.subr.bf16.mxu0 0
        %764 = vmatpush1.bf16.msra.mxu0 %v740
        %765 = vmatprep.subr.bf16.mxu0 0
        %766 = vmatpush1.bf16.msra.mxu0 %v741
        %767 = vmatprep.subr.bf16.mxu0 0
        %768 = vmatpush1.bf16.msra.mxu0 %v742
        %769 = vmatprep.subr.bf16.mxu0 0
        %770 = vmatpush1.bf16.msra.mxu0 %v743
        %771 = vmatprep.subr.bf16.mxu0 0
        %772 = vmatpush1.bf16.msra.mxu0 %v744
        %773 = vmatprep.subr.bf16.mxu0 0
        %774 = vmatpush1.bf16.msra.mxu0 %v745
        %775 = vmatprep.subr.bf16.mxu0 0
        %776 = vmatpush1.bf16.msra.mxu0 %v746
        %777 = vmatprep.subr.bf16.mxu0 0
        %778 = vmatpush1.bf16.msra.mxu0 0
        %779 = vmatprep.subr.bf16.mxu0 0
        %780 = vmatpush1.bf16.msra.mxu0 0
        %781 = vmatprep.subr.bf16.mxu0 0
        %782 = vmatpush1.bf16.msra.mxu0 0
        %783 = vmatprep.subr.bf16.mxu0 0
        %784 = vmatpush1.bf16.msra.mxu0 0
        %785 = vmatprep.subr.bf16.mxu0 0
        %786 = vmatpush1.bf16.msra.mxu0 0
        %787 = vmatprep.subr.bf16.mxu0 0
        %788 = vmatpush1.bf16.msra.mxu0 0
        %789 = vmatprep.subr.bf16.mxu0 0
        %790 = vmatpush1.bf16.msra.mxu0 0
        %791 = vmatprep.mubr.bf16.mxu0 %v757
        %792 = vmatmul.mubr.bf16.gmra.mrb[0].mxu0 %v697
        %v793 = vpop.f32.mrb[0].mxu0
        %v794 = vadd.f32 0.0, %v793
        %v795 = vpop.f32.mrb[0].mxu0
        %v796 = vpop.f32.mrb[0].mxu0
        %v797 = vadd.f32 0.0, %v796
        %v798 = vpop.f32.mrb[0].mxu0
        %799 = vdwg.mxu0
        %v800 = vadd.f32 %v657, %v794
        %v801 = vadd.f32 %v660, %v797
        %v802 = vld [vmem:[%s3] sm:$0x1]
        %v803 = vlaneseq
        %v804 = vshrl.u32 %v803, 7
        %v805 = vsub.s32 0, %v804
        %v806 = vrot.slane %v802, %v805
        %v807 = vadd.f32 %v800, %v806
        %v808 = vadd.f32 %v801, %v806
        %v809 = vmax.f32 %v807, 0.0
        %v810 = vmax.f32 %v808, 0.0
        %v813 = vrot.slane %v809, 7
        %v814 = vrot.slane %v810, 7
        %v815 = vsel %vm365, %v813, %v814
        %816 = vrot.lane.b32.xlu0 %v813, 8
        %v817 = vpop.permute.xlu0 %816
        %818 = vrot.lane.b32.xlu0 %v815, 8
        %v819 = vpop.permute.xlu0 %818
        %820 = vrot.lane.b32.xlu0 %v814, 8
        %v821 = vpop.permute.xlu0 %820
        %825 = vst.msk [vmem:[#allocation2] sm:$0xfe] %vm378, %v817
        %826 = vst.msk [vmem:[#allocation2 + $0x8] sm:$0xfe] %vm380, %v817
        %827 = vst.msk [vmem:[#allocation2 + $0x10] sm:$0xff] %vm382, %v819
        %828 = vst.msk [vmem:[#allocation2 + $0x18] sm:$0xff] %vm349, %v819
        %829 = vst.msk [vmem:[#allocation2 + $0x20] sm:$0x1] %vm385, %v821
        %830 = vst.msk [vmem:[#allocation2 + $0x28] sm:$0x1] %vm387, %v821
        %v831 = vld [vmem:[#allocation2] sm:$0xff]
        %v832 = vld [vmem:[#allocation2 + $0x8] sm:$0xff]
        %v833 = vld [vmem:[#allocation2 + $0x10] sm:$0xff]
        %v834 = vld [vmem:[#allocation2 + $0x18] sm:$0xff]
        %v835 = vpack.c.bf16 %v833, %v831
        %v836 = vpack.c.bf16 %v834, %v832
        %s837 = scalar_lea.vmem [#allocation8], 216
        %v838 = vld [vmem:[%s837] sm:$0xf]
        %v839 = vld [vmem:[%s837 + $0x4] sm:$0xf]
        %v840 = vld [vmem:[%s837 + $0x8] sm:$0xf]
        %v841 = vld [vmem:[%s837 + $0xc] sm:$0xf]
        %v842 = vld [vmem:[%s837 + $0x10] sm:$0xf]
        %v843 = vld [vmem:[%s837 + $0x14] sm:$0xf]
        %v844 = vld [vmem:[%s837 + $0x18] sm:$0xf]
        %v845 = vld [vmem:[%s837 + $0x1c] sm:$0xf]
        %v846 = vld [vmem:[%s837 + $0x20] sm:$0xf]
        %v847 = vld [vmem:[%s837 + $0x24] sm:$0xf]
        %v848 = vld [vmem:[%s837 + $0x28] sm:$0xf]
        %v849 = vld [vmem:[%s837 + $0x2c] sm:$0xf]
        %v850 = vld [vmem:[%s837 + $0x30] sm:$0xf]
        %v851 = vld [vmem:[%s837 + $0x34] sm:$0xf]
        %v852 = vld [vmem:[%s837 + $0x38] sm:$0xf]
        %v853 = vld [vmem:[%s837 + $0x3c] sm:$0xf]
        %v854 = vld [vmem:[%s837 + $0x40] sm:$0xf]
        %v855 = vld [vmem:[%s837 + $0x44] sm:$0xf]
        %v856 = vld [vmem:[#allocation2] sm:$0xfe]
        %v857 = vld [vmem:[#allocation2 + $0x8] sm:$0xfe]
        %v858 = vld [vmem:[#allocation2 + $0x20] sm:$0x1]
        %v859 = vld [vmem:[#allocation2 + $0x28] sm:$0x1]
        %v860 = vpack.c.bf16 %v833, %v856
        %v861 = vpack.c.bf16 %v834, %v857
        %v862 = vpack.c.bf16 %v858, %v858
        %v863 = vpack.c.bf16 %v859, %v859
        %s864 = scalar_lea.vmem [#allocation8], 288
        %v865 = vld [vmem:[%s864] sm:$0xf]
        %v866 = vld [vmem:[%s864 + $0x4] sm:$0xf]
        %v867 = vld [vmem:[%s864 + $0x8] sm:$0xf]
        %v868 = vld [vmem:[%s864 + $0xc] sm:$0xf]
        %v869 = vld [vmem:[%s864 + $0x10] sm:$0xf]
        %v870 = vld [vmem:[%s864 + $0x14] sm:$0xf]
        %v871 = vld [vmem:[%s864 + $0x18] sm:$0xf]
        %v872 = vld [vmem:[%s864 + $0x1c] sm:$0xf]
        %v873 = vld [vmem:[%s864 + $0x20] sm:$0xf]
        %v874 = vld [vmem:[%s864 + $0x24] sm:$0xf]
        %v875 = vld [vmem:[%s864 + $0x28] sm:$0xf]
        %v876 = vld [vmem:[%s864 + $0x2c] sm:$0xf]
        %v877 = vld [vmem:[%s864 + $0x30] sm:$0xf]
        %v878 = vld [vmem:[%s864 + $0x34] sm:$0xf]
        %v879 = vld [vmem:[%s864 + $0x38] sm:$0xf]
        %v880 = vld [vmem:[%s864 + $0x3c] sm:$0xf]
        %v881 = vld [vmem:[%s864 + $0x40] sm:$0xf]
        %v882 = vld [vmem:[%s864 + $0x44] sm:$0xf]
        %v884 = vshrl.u32 %v860, 16
        %v886 = vshll.u32 %v860, 16
        %v888 = vrot.slane %v886, 1
        %v889 = vor.u32 %v884, %v888
        %v891 = vshll.u32 %v862, 16
        %v893 = vrot.slane %v891, 1
        %v894 = vsel %vm440, %v889, %v893
        %v896 = vshrl.u32 %v861, 16
        %v898 = vshll.u32 %v861, 16
        %v900 = vrot.slane %v898, 1
        %v901 = vor.u32 %v896, %v900
        %v903 = vshll.u32 %v863, 16
        %v905 = vrot.slane %v903, 1
        %v906 = vsel %vm440, %v901, %v905
        %v926 = vunpack.c.l.b16 %v865
        %v927 = vunpack.c.l.b16 %v866
        %v928 = vunpack.c.l.b16 %v867
        %v929 = vunpack.c.l.b16 %v868
        %v930 = vunpack.c.l.b16 %v869
        %v931 = vunpack.c.l.b16 %v870
        %v932 = vunpack.c.l.b16 %v871
        %v933 = vunpack.c.l.b16 %v872
        %v934 = vunpack.c.l.b16 %v873
        %v935 = vunpack.c.l.b16 %v874
        %v936 = vunpack.c.l.b16 %v875
        %v937 = vunpack.c.l.b16 %v876
        %v938 = vunpack.c.l.b16 %v877
        %v939 = vunpack.c.l.b16 %v878
        %v940 = vunpack.c.l.b16 %v879
        %v941 = vunpack.c.l.b16 %v880
        %v942 = vunpack.c.l.b16 %v881
        %v943 = vunpack.c.l.b16 %v882
        %v944 = vpack.c.b16 %v927, %v926
        %v945 = vpack.c.b16 %v929, %v928
        %v946 = vpack.c.b16 %v931, %v930
        %v947 = vpack.c.b16 %v933, %v932
        %v948 = vpack.c.b16 %v935, %v934
        %v949 = vpack.c.b16 %v937, %v936
        %v950 = vpack.c.b16 %v939, %v938
        %v951 = vpack.c.b16 %v941, %v940
        %v952 = vpack.c.b16 %v943, %v942
        %v963 = vsel %vm520, %v906, 0
        %965 = vmatprep.subr.bf16.mxu0 0
        %966 = vmatpush1.bf16.msra.mxu0 %v944
        %967 = vmatprep.subr.bf16.mxu0 0
        %968 = vmatpush1.bf16.msra.mxu0 %v945
        %969 = vmatprep.subr.bf16.mxu0 0
        %970 = vmatpush1.bf16.msra.mxu0 %v946
        %971 = vmatprep.subr.bf16.mxu0 0
        %972 = vmatpush1.bf16.msra.mxu0 %v947
        %973 = vmatprep.subr.bf16.mxu0 0
        %974 = vmatpush1.bf16.msra.mxu0 %v948
        %975 = vmatprep.subr.bf16.mxu0 0
        %976 = vmatpush1.bf16.msra.mxu0 %v949
        %977 = vmatprep.subr.bf16.mxu0 0
        %978 = vmatpush1.bf16.msra.mxu0 %v950
        %979 = vmatprep.subr.bf16.mxu0 0
        %980 = vmatpush1.bf16.msra.mxu0 %v951
        %981 = vmatprep.subr.bf16.mxu0 0
        %982 = vmatpush1.bf16.msra.mxu0 %v952
        %983 = vmatprep.subr.bf16.mxu0 0
        %984 = vmatpush1.bf16.msra.mxu0 0
        %985 = vmatprep.subr.bf16.mxu0 0
        %986 = vmatpush1.bf16.msra.mxu0 0
        %987 = vmatprep.subr.bf16.mxu0 0
        %988 = vmatpush1.bf16.msra.mxu0 0
        %989 = vmatprep.subr.bf16.mxu0 0
        %990 = vmatpush1.bf16.msra.mxu0 0
        %991 = vmatprep.subr.bf16.mxu0 0
        %992 = vmatpush1.bf16.msra.mxu0 0
        %993 = vmatprep.subr.bf16.mxu0 0
        %994 = vmatpush1.bf16.msra.mxu0 0
        %995 = vmatprep.subr.bf16.mxu0 0
        %996 = vmatpush1.bf16.msra.mxu0 0
        %997 = vmatprep.mubr.bf16.mxu0 %v963
        %998 = vmatmul.mubr.bf16.gmra.mrb[0].mxu0 %v894
        %v999 = vpop.f32.mrb[0].mxu0
        %v1000 = vadd.f32 0.0, %v999
        %v1001 = vpop.f32.mrb[0].mxu0
        %v1002 = vpop.f32.mrb[0].mxu0
        %v1003 = vadd.f32 0.0, %v1002
        %v1004 = vpop.f32.mrb[0].mxu0
        %1005 = vdwg.mxu0
        %v1024 = vunpack.c.l.b16 %v838
        %v1025 = vunpack.c.l.b16 %v839
        %v1026 = vunpack.c.l.b16 %v840
        %v1027 = vunpack.c.l.b16 %v841
        %v1028 = vunpack.c.l.b16 %v842
        %v1029 = vunpack.c.l.b16 %v843
        %v1030 = vunpack.c.l.b16 %v844
        %v1031 = vunpack.c.l.b16 %v845
        %v1032 = vunpack.c.l.b16 %v846
        %v1033 = vunpack.c.l.b16 %v847
        %v1034 = vunpack.c.l.b16 %v848
        %v1035 = vunpack.c.l.b16 %v849
        %v1036 = vunpack.c.l.b16 %v850
        %v1037 = vunpack.c.l.b16 %v851
        %v1038 = vunpack.c.l.b16 %v852
        %v1039 = vunpack.c.l.b16 %v853
        %v1040 = vunpack.c.l.b16 %v854
        %v1041 = vunpack.c.l.b16 %v855
        %v1042 = vpack.c.b16 %v1025, %v1024
        %v1043 = vpack.c.b16 %v1027, %v1026
        %v1044 = vpack.c.b16 %v1029, %v1028
        %v1045 = vpack.c.b16 %v1031, %v1030
        %v1046 = vpack.c.b16 %v1033, %v1032
        %v1047 = vpack.c.b16 %v1035, %v1034
        %v1048 = vpack.c.b16 %v1037, %v1036
        %v1049 = vpack.c.b16 %v1039, %v1038
        %v1050 = vpack.c.b16 %v1041, %v1040
        %v1061 = vsel %vm520, %v836, 0
        %1063 = vmatprep.subr.bf16.mxu0 0
        %1064 = vmatpush1.bf16.msra.mxu0 %v1042
        %1065 = vmatprep.subr.bf16.mxu0 0
        %1066 = vmatpush1.bf16.msra.mxu0 %v1043
        %1067 = vmatprep.subr.bf16.mxu0 0
        %1068 = vmatpush1.bf16.msra.mxu0 %v1044
        %1069 = vmatprep.subr.bf16.mxu0 0
        %1070 = vmatpush1.bf16.msra.mxu0 %v1045
        %1071 = vmatprep.subr.bf16.mxu0 0
        %1072 = vmatpush1.bf16.msra.mxu0 %v1046
        %1073 = vmatprep.subr.bf16.mxu0 0
        %1074 = vmatpush1.bf16.msra.mxu0 %v1047
        %1075 = vmatprep.subr.bf16.mxu0 0
        %1076 = vmatpush1.bf16.msra.mxu0 %v1048
        %1077 = vmatprep.subr.bf16.mxu0 0
        %1078 = vmatpush1.bf16.msra.mxu0 %v1049
        %1079 = vmatprep.subr.bf16.mxu0 0
        %1080 = vmatpush1.bf16.msra.mxu0 %v1050
        %1081 = vmatprep.subr.bf16.mxu0 0
        %1082 = vmatpush1.bf16.msra.mxu0 0
        %1083 = vmatprep.subr.bf16.mxu0 0
        %1084 = vmatpush1.bf16.msra.mxu0 0
        %1085 = vmatprep.subr.bf16.mxu0 0
        %1086 = vmatpush1.bf16.msra.mxu0 0
        %1087 = vmatprep.subr.bf16.mxu0 0
        %1088 = vmatpush1.bf16.msra.mxu0 0
        %1089 = vmatprep.subr.bf16.mxu0 0
        %1090 = vmatpush1.bf16.msra.mxu0 0
        %1091 = vmatprep.subr.bf16.mxu0 0
        %1092 = vmatpush1.bf16.msra.mxu0 0
        %1093 = vmatprep.subr.bf16.mxu0 0
        %1094 = vmatpush1.bf16.msra.mxu0 0
        %1095 = vmatprep.mubr.bf16.mxu0 %v1061
        %1096 = vmatmul.mubr.bf16.gmra.mrb[0].mxu0 %v835
        %v1097 = vpop.f32.mrb[0].mxu0
        %v1098 = vadd.f32 %v1000, %v1097
        %v1099 = vpop.f32.mrb[0].mxu0
        %v1100 = vpop.f32.mrb[0].mxu0
        %v1101 = vadd.f32 %v1003, %v1100
        %v1102 = vpop.f32.mrb[0].mxu0
        %1103 = vdwg.mxu0
        %v1104 = vld [vmem:[#allocation2] sm:$0xfc]
        %v1105 = vld [vmem:[#allocation2 + $0x8] sm:$0xfc]
        %v1106 = vld [vmem:[#allocation2 + $0x20] sm:$0x3]
        %v1107 = vld [vmem:[#allocation2 + $0x28] sm:$0x3]
        %v1108 = vpack.c.bf16 %v833, %v1104
        %v1109 = vpack.c.bf16 %v834, %v1105
        %v1110 = vpack.c.bf16 %v1106, %v1106
        %v1111 = vpack.c.bf16 %v1107, %v1107
        %s1112 = scalar_lea.vmem [#allocation8], 360
        %v1113 = vld [vmem:[%s1112] sm:$0xf]
        %v1114 = vld [vmem:[%s1112 + $0x4] sm:$0xf]
        %v1115 = vld [vmem:[%s1112 + $0x8] sm:$0xf]
        %v1116 = vld [vmem:[%s1112 + $0xc] sm:$0xf]
        %v1117 = vld [vmem:[%s1112 + $0x10] sm:$0xf]
        %v1118 = vld [vmem:[%s1112 + $0x14] sm:$0xf]
        %v1119 = vld [vmem:[%s1112 + $0x18] sm:$0xf]
        %v1120 = vld [vmem:[%s1112 + $0x1c] sm:$0xf]
        %v1121 = vld [vmem:[%s1112 + $0x20] sm:$0xf]
        %v1122 = vld [vmem:[%s1112 + $0x24] sm:$0xf]
        %v1123 = vld [vmem:[%s1112 + $0x28] sm:$0xf]
        %v1124 = vld [vmem:[%s1112 + $0x2c] sm:$0xf]
        %v1125 = vld [vmem:[%s1112 + $0x30] sm:$0xf]
        %v1126 = vld [vmem:[%s1112 + $0x34] sm:$0xf]
        %v1127 = vld [vmem:[%s1112 + $0x38] sm:$0xf]
        %v1128 = vld [vmem:[%s1112 + $0x3c] sm:$0xf]
        %v1129 = vld [vmem:[%s1112 + $0x40] sm:$0xf]
        %v1130 = vld [vmem:[%s1112 + $0x44] sm:$0xf]
        %v1135 = vrot.slane %v1108, 1
        %v1136 = vrot.slane %v1110, 1
        %v1137 = vsel %vm694, %v1135, %v1136
        %v1138 = vrot.slane %v1109, 1
        %v1139 = vrot.slane %v1111, 1
        %v1140 = vsel %vm694, %v1138, %v1139
        %v1160 = vunpack.c.l.b16 %v1113
        %v1161 = vunpack.c.l.b16 %v1114
        %v1162 = vunpack.c.l.b16 %v1115
        %v1163 = vunpack.c.l.b16 %v1116
        %v1164 = vunpack.c.l.b16 %v1117
        %v1165 = vunpack.c.l.b16 %v1118
        %v1166 = vunpack.c.l.b16 %v1119
        %v1167 = vunpack.c.l.b16 %v1120
        %v1168 = vunpack.c.l.b16 %v1121
        %v1169 = vunpack.c.l.b16 %v1122
        %v1170 = vunpack.c.l.b16 %v1123
        %v1171 = vunpack.c.l.b16 %v1124
        %v1172 = vunpack.c.l.b16 %v1125
        %v1173 = vunpack.c.l.b16 %v1126
        %v1174 = vunpack.c.l.b16 %v1127
        %v1175 = vunpack.c.l.b16 %v1128
        %v1176 = vunpack.c.l.b16 %v1129
        %v1177 = vunpack.c.l.b16 %v1130
        %v1178 = vpack.c.b16 %v1161, %v1160
        %v1179 = vpack.c.b16 %v1163, %v1162
        %v1180 = vpack.c.b16 %v1165, %v1164
        %v1181 = vpack.c.b16 %v1167, %v1166
        %v1182 = vpack.c.b16 %v1169, %v1168
        %v1183 = vpack.c.b16 %v1171, %v1170
        %v1184 = vpack.c.b16 %v1173, %v1172
        %v1185 = vpack.c.b16 %v1175, %v1174
        %v1186 = vpack.c.b16 %v1177, %v1176
        %v1197 = vsel %vm520, %v1140, 0
        %1199 = vmatprep.subr.bf16.mxu0 0
        %1200 = vmatpush1.bf16.msra.mxu0 %v1178
        %1201 = vmatprep.subr.bf16.mxu0 0
        %1202 = vmatpush1.bf16.msra.mxu0 %v1179
        %1203 = vmatprep.subr.bf16.mxu0 0
        %1204 = vmatpush1.bf16.msra.mxu0 %v1180
        %1205 = vmatprep.subr.bf16.mxu0 0
        %1206 = vmatpush1.bf16.msra.mxu0 %v1181
        %1207 = vmatprep.subr.bf16.mxu0 0
        %1208 = vmatpush1.bf16.msra.mxu0 %v1182
        %1209 = vmatprep.subr.bf16.mxu0 0
        %1210 = vmatpush1.bf16.msra.mxu0 %v1183
        %1211 = vmatprep.subr.bf16.mxu0 0
        %1212 = vmatpush1.bf16.msra.mxu0 %v1184
        %1213 = vmatprep.subr.bf16.mxu0 0
        %1214 = vmatpush1.bf16.msra.mxu0 %v1185
        %1215 = vmatprep.subr.bf16.mxu0 0
        %1216 = vmatpush1.bf16.msra.mxu0 %v1186
        %1217 = vmatprep.subr.bf16.mxu0 0
        %1218 = vmatpush1.bf16.msra.mxu0 0
        %1219 = vmatprep.subr.bf16.mxu0 0
        %1220 = vmatpush1.bf16.msra.mxu0 0
        %1221 = vmatprep.subr.bf16.mxu0 0
        %1222 = vmatpush1.bf16.msra.mxu0 0
        %1223 = vmatprep.subr.bf16.mxu0 0
        %1224 = vmatpush1.bf16.msra.mxu0 0
        %1225 = vmatprep.subr.bf16.mxu0 0
        %1226 = vmatpush1.bf16.msra.mxu0 0
        %1227 = vmatprep.subr.bf16.mxu0 0
        %1228 = vmatpush1.bf16.msra.mxu0 0
        %1229 = vmatprep.subr.bf16.mxu0 0
        %1230 = vmatpush1.bf16.msra.mxu0 0
        %1231 = vmatprep.mubr.bf16.mxu0 %v1197
        %1232 = vmatmul.mubr.bf16.gmra.mrb[0].mxu0 %v1137
        %v1233 = vpop.f32.mrb[0].mxu0
        %v1234 = vadd.f32 0.0, %v1233
        %v1235 = vpop.f32.mrb[0].mxu0
        %v1236 = vpop.f32.mrb[0].mxu0
        %v1237 = vadd.f32 0.0, %v1236
        %v1238 = vpop.f32.mrb[0].mxu0
        %1239 = vdwg.mxu0
        %v1240 = vadd.f32 %v1098, %v1234
        %v1241 = vadd.f32 %v1101, %v1237
        %v1242 = vld [vmem:[%s3 + $0x1] sm:$0x1]
        %v1243 = vlaneseq
        %v1244 = vshrl.u32 %v1243, 7
        %v1245 = vsub.s32 0, %v1244
        %v1246 = vrot.slane %v1242, %v1245
        %v1247 = vadd.f32 %v1240, %v1246
        %v1248 = vadd.f32 %v1241, %v1246
        %v1249 = vadd.f32 %v1247, %v359
        %v1250 = vadd.f32 %v1248, %v360
        %v1251 = vld [vmem:[%s288] sm:$0xff]
        %v1252 = vld [vmem:[%s288 + $0x8] sm:$0xff]
        %v1253 = vadd.f32 %v1249, %v1251
        %v1254 = vadd.f32 %v1250, %v1252
        %v1255 = vmax.f32 %v1253, 0.0
        %v1256 = vmax.f32 %v1254, 0.0
        %v1259 = vrot.slane %v1255, 7
        %v1260 = vrot.slane %v1256, 7
        %v1261 = vsel %vm365, %v1259, %v1260
        %1262 = vrot.lane.b32.xlu0 %v1259, 8
        %v1263 = vpop.permute.xlu0 %1262
        %1264 = vrot.lane.b32.xlu0 %v1261, 8
        %v1265 = vpop.permute.xlu0 %1264
        %1266 = vrot.lane.b32.xlu0 %v1260, 8
        %v1267 = vpop.permute.xlu0 %1266
        %1271 = vst.msk [vmem:[#allocation2] sm:$0xfe] %vm378, %v1263
        %1272 = vst.msk [vmem:[#allocation2 + $0x8] sm:$0xfe] %vm380, %v1263
        %1273 = vst.msk [vmem:[#allocation2 + $0x10] sm:$0xff] %vm382, %v1265
        %1274 = vst.msk [vmem:[#allocation2 + $0x18] sm:$0xff] %vm349, %v1265
        %1275 = vst.msk [vmem:[#allocation2 + $0x20] sm:$0x1] %vm385, %v1267
        %1276 = vst.msk [vmem:[#allocation2 + $0x28] sm:$0x1] %vm387, %v1267
        %v1277 = vld [vmem:[#allocation2] sm:$0xff]
        %v1278 = vld [vmem:[#allocation2 + $0x8] sm:$0xff]
        %v1279 = vld [vmem:[#allocation2 + $0x10] sm:$0xff]
        %v1280 = vld [vmem:[#allocation2 + $0x18] sm:$0xff]
        %v1281 = vpack.c.bf16 %v1279, %v1277
        %v1282 = vpack.c.bf16 %v1280, %v1278
        %s1283 = scalar_lea.vmem [#allocation8], 432
        %v1284 = vld [vmem:[%s1283] sm:$0xf]
        %v1285 = vld [vmem:[%s1283 + $0x4] sm:$0xf]
        %v1286 = vld [vmem:[%s1283 + $0x8] sm:$0xf]
        %v1287 = vld [vmem:[%s1283 + $0xc] sm:$0xf]
        %v1288 = vld [vmem:[%s1283 + $0x10] sm:$0xf]
        %v1289 = vld [vmem:[%s1283 + $0x14] sm:$0xf]
        %v1290 = vld [vmem:[%s1283 + $0x18] sm:$0xf]
        %v1291 = vld [vmem:[%s1283 + $0x1c] sm:$0xf]
        %v1292 = vld [vmem:[%s1283 + $0x20] sm:$0xf]
        %v1293 = vld [vmem:[%s1283 + $0x24] sm:$0xf]
        %v1294 = vld [vmem:[%s1283 + $0x28] sm:$0xf]
        %v1295 = vld [vmem:[%s1283 + $0x2c] sm:$0xf]
        %v1296 = vld [vmem:[%s1283 + $0x30] sm:$0xf]
        %v1297 = vld [vmem:[%s1283 + $0x34] sm:$0xf]
        %v1298 = vld [vmem:[%s1283 + $0x38] sm:$0xf]
        %v1299 = vld [vmem:[%s1283 + $0x3c] sm:$0xf]
        %v1300 = vld [vmem:[%s1283 + $0x40] sm:$0xf]
        %v1301 = vld [vmem:[%s1283 + $0x44] sm:$0xf]
        %v1302 = vld [vmem:[#allocation2] sm:$0xfe]
        %v1303 = vld [vmem:[#allocation2 + $0x8] sm:$0xfe]
        %v1304 = vld [vmem:[#allocation2 + $0x20] sm:$0x1]
        %v1305 = vld [vmem:[#allocation2 + $0x28] sm:$0x1]
        %v1306 = vpack.c.bf16 %v1279, %v1302
        %v1307 = vpack.c.bf16 %v1280, %v1303
        %v1308 = vpack.c.bf16 %v1304, %v1304
        %v1309 = vpack.c.bf16 %v1305, %v1305
        %s1310 = scalar_lea.vmem [#allocation8], 504
        %v1311 = vld [vmem:[%s1310] sm:$0xf]
        %v1312 = vld [vmem:[%s1310 + $0x4] sm:$0xf]
        %v1313 = vld [vmem:[%s1310 + $0x8] sm:$0xf]
        %v1314 = vld [vmem:[%s1310 + $0xc] sm:$0xf]
        %v1315 = vld [vmem:[%s1310 + $0x10] sm:$0xf]
        %v1316 = vld [vmem:[%s1310 + $0x14] sm:$0xf]
        %v1317 = vld [vmem:[%s1310 + $0x18] sm:$0xf]
        %v1318 = vld [vmem:[%s1310 + $0x1c] sm:$0xf]
        %v1319 = vld [vmem:[%s1310 + $0x20] sm:$0xf]
        %v1320 = vld [vmem:[%s1310 + $0x24] sm:$0xf]
        %v1321 = vld [vmem:[%s1310 + $0x28] sm:$0xf]
        %v1322 = vld [vmem:[%s1310 + $0x2c] sm:$0xf]
        %v1323 = vld [vmem:[%s1310 + $0x30] sm:$0xf]
        %v1324 = vld [vmem:[%s1310 + $0x34] sm:$0xf]
        %v1325 = vld [vmem:[%s1310 + $0x38] sm:$0xf]
        %v1326 = vld [vmem:[%s1310 + $0x3c] sm:$0xf]
        %v1327 = vld [vmem:[%s1310 + $0x40] sm:$0xf]
        %v1328 = vld [vmem:[%s1310 + $0x44] sm:$0xf]
        %v1330 = vshrl.u32 %v1306, 16
        %v1332 = vshll.u32 %v1306, 16
        %v1334 = vrot.slane %v1332, 1
        %v1335 = vor.u32 %v1330, %v1334
        %v1337 = vshll.u32 %v1308, 16
        %v1339 = vrot.slane %v1337, 1
        %v1340 = vsel %vm440, %v1335, %v1339
        %v1342 = vshrl.u32 %v1307, 16
        %v1344 = vshll.u32 %v1307, 16
        %v1346 = vrot.slane %v1344, 1
        %v1347 = vor.u32 %v1342, %v1346
        %v1349 = vshll.u32 %v1309, 16
        %v1351 = vrot.slane %v1349, 1
        %v1352 = vsel %vm440, %v1347, %v1351
        %v1372 = vunpack.c.l.b16 %v1311
        %v1373 = vunpack.c.l.b16 %v1312
        %v1374 = vunpack.c.l.b16 %v1313
        %v1375 = vunpack.c.l.b16 %v1314
        %v1376 = vunpack.c.l.b16 %v1315
        %v1377 = vunpack.c.l.b16 %v1316
        %v1378 = vunpack.c.l.b16 %v1317
        %v1379 = vunpack.c.l.b16 %v1318
        %v1380 = vunpack.c.l.b16 %v1319
        %v1381 = vunpack.c.l.b16 %v1320
        %v1382 = vunpack.c.l.b16 %v1321
        %v1383 = vunpack.c.l.b16 %v1322
        %v1384 = vunpack.c.l.b16 %v1323
        %v1385 = vunpack.c.l.b16 %v1324
        %v1386 = vunpack.c.l.b16 %v1325
        %v1387 = vunpack.c.l.b16 %v1326
        %v1388 = vunpack.c.l.b16 %v1327
        %v1389 = vunpack.c.l.b16 %v1328
        %v1390 = vpack.c.b16 %v1373, %v1372
        %v1391 = vpack.c.b16 %v1375, %v1374
        %v1392 = vpack.c.b16 %v1377, %v1376
        %v1393 = vpack.c.b16 %v1379, %v1378
        %v1394 = vpack.c.b16 %v1381, %v1380
        %v1395 = vpack.c.b16 %v1383, %v1382
        %v1396 = vpack.c.b16 %v1385, %v1384
        %v1397 = vpack.c.b16 %v1387, %v1386
        %v1398 = vpack.c.b16 %v1389, %v1388
        %v1409 = vsel %vm520, %v1352, 0
        %1411 = vmatprep.subr.bf16.mxu0 0
        %1412 = vmatpush1.bf16.msra.mxu0 %v1390
        %1413 = vmatprep.subr.bf16.mxu0 0
        %1414 = vmatpush1.bf16.msra.mxu0 %v1391
        %1415 = vmatprep.subr.bf16.mxu0 0
        %1416 = vmatpush1.bf16.msra.mxu0 %v1392
        %1417 = vmatprep.subr.bf16.mxu0 0
        %1418 = vmatpush1.bf16.msra.mxu0 %v1393
        %1419 = vmatprep.subr.bf16.mxu0 0
        %1420 = vmatpush1.bf16.msra.mxu0 %v1394
        %1421 = vmatprep.subr.bf16.mxu0 0
        %1422 = vmatpush1.bf16.msra.mxu0 %v1395
        %1423 = vmatprep.subr.bf16.mxu0 0
        %1424 = vmatpush1.bf16.msra.mxu0 %v1396
        %1425 = vmatprep.subr.bf16.mxu0 0
        %1426 = vmatpush1.bf16.msra.mxu0 %v1397
        %1427 = vmatprep.subr.bf16.mxu0 0
        %1428 = vmatpush1.bf16.msra.mxu0 %v1398
        %1429 = vmatprep.subr.bf16.mxu0 0
        %1430 = vmatpush1.bf16.msra.mxu0 0
        %1431 = vmatprep.subr.bf16.mxu0 0
        %1432 = vmatpush1.bf16.msra.mxu0 0
        %1433 = vmatprep.subr.bf16.mxu0 0
        %1434 = vmatpush1.bf16.msra.mxu0 0
        %1435 = vmatprep.subr.bf16.mxu0 0
        %1436 = vmatpush1.bf16.msra.mxu0 0
        %1437 = vmatprep.subr.bf16.mxu0 0
        %1438 = vmatpush1.bf16.msra.mxu0 0
        %1439 = vmatprep.subr.bf16.mxu0 0
        %1440 = vmatpush1.bf16.msra.mxu0 0
        %1441 = vmatprep.subr.bf16.mxu0 0
        %1442 = vmatpush1.bf16.msra.mxu0 0
        %1443 = vmatprep.mubr.bf16.mxu0 %v1409
        %1444 = vmatmul.mubr.bf16.gmra.mrb[0].mxu0 %v1340
        %v1445 = vpop.f32.mrb[0].mxu0
        %v1446 = vadd.f32 0.0, %v1445
        %v1447 = vpop.f32.mrb[0].mxu0
        %v1448 = vpop.f32.mrb[0].mxu0
        %v1449 = vadd.f32 0.0, %v1448
        %v1450 = vpop.f32.mrb[0].mxu0
        %1451 = vdwg.mxu0
        %v1470 = vunpack.c.l.b16 %v1284
        %v1471 = vunpack.c.l.b16 %v1285
        %v1472 = vunpack.c.l.b16 %v1286
        %v1473 = vunpack.c.l.b16 %v1287
        %v1474 = vunpack.c.l.b16 %v1288
        %v1475 = vunpack.c.l.b16 %v1289
        %v1476 = vunpack.c.l.b16 %v1290
        %v1477 = vunpack.c.l.b16 %v1291
        %v1478 = vunpack.c.l.b16 %v1292
        %v1479 = vunpack.c.l.b16 %v1293
        %v1480 = vunpack.c.l.b16 %v1294
        %v1481 = vunpack.c.l.b16 %v1295
        %v1482 = vunpack.c.l.b16 %v1296
        %v1483 = vunpack.c.l.b16 %v1297
        %v1484 = vunpack.c.l.b16 %v1298
        %v1485 = vunpack.c.l.b16 %v1299
        %v1486 = vunpack.c.l.b16 %v1300
        %v1487 = vunpack.c.l.b16 %v1301
        %v1488 = vpack.c.b16 %v1471, %v1470
        %v1489 = vpack.c.b16 %v1473, %v1472
        %v1490 = vpack.c.b16 %v1475, %v1474
        %v1491 = vpack.c.b16 %v1477, %v1476
        %v1492 = vpack.c.b16 %v1479, %v1478
        %v1493 = vpack.c.b16 %v1481, %v1480
        %v1494 = vpack.c.b16 %v1483, %v1482
        %v1495 = vpack.c.b16 %v1485, %v1484
        %v1496 = vpack.c.b16 %v1487, %v1486
        %v1507 = vsel %vm520, %v1282, 0
        %1509 = vmatprep.subr.bf16.mxu0 0
        %1510 = vmatpush1.bf16.msra.mxu0 %v1488
        %1511 = vmatprep.subr.bf16.mxu0 0
        %1512 = vmatpush1.bf16.msra.mxu0 %v1489
        %1513 = vmatprep.subr.bf16.mxu0 0
        %1514 = vmatpush1.bf16.msra.mxu0 %v1490
        %1515 = vmatprep.subr.bf16.mxu0 0
        %1516 = vmatpush1.bf16.msra.mxu0 %v1491
        %1517 = vmatprep.subr.bf16.mxu0 0
        %1518 = vmatpush1.bf16.msra.mxu0 %v1492
        %1519 = vmatprep.subr.bf16.mxu0 0
        %1520 = vmatpush1.bf16.msra.mxu0 %v1493
        %1521 = vmatprep.subr.bf16.mxu0 0
        %1522 = vmatpush1.bf16.msra.mxu0 %v1494
        %1523 = vmatprep.subr.bf16.mxu0 0
        %1524 = vmatpush1.bf16.msra.mxu0 %v1495
        %1525 = vmatprep.subr.bf16.mxu0 0
        %1526 = vmatpush1.bf16.msra.mxu0 %v1496
        %1527 = vmatprep.subr.bf16.mxu0 0
        %1528 = vmatpush1.bf16.msra.mxu0 0
        %1529 = vmatprep.subr.bf16.mxu0 0
        %1530 = vmatpush1.bf16.msra.mxu0 0
        %1531 = vmatprep.subr.bf16.mxu0 0
        %1532 = vmatpush1.bf16.msra.mxu0 0
        %1533 = vmatprep.subr.bf16.mxu0 0
        %1534 = vmatpush1.bf16.msra.mxu0 0
        %1535 = vmatprep.subr.bf16.mxu0 0
        %1536 = vmatpush1.bf16.msra.mxu0 0
        %1537 = vmatprep.subr.bf16.mxu0 0
        %1538 = vmatpush1.bf16.msra.mxu0 0
        %1539 = vmatprep.subr.bf16.mxu0 0
        %1540 = vmatpush1.bf16.msra.mxu0 0
        %1541 = vmatprep.mubr.bf16.mxu0 %v1507
        %1542 = vmatmul.mubr.bf16.gmra.mrb[0].mxu0 %v1281
        %v1543 = vpop.f32.mrb[0].mxu0
        %v1544 = vadd.f32 %v1446, %v1543
        %v1545 = vpop.f32.mrb[0].mxu0
        %v1546 = vpop.f32.mrb[0].mxu0
        %v1547 = vadd.f32 %v1449, %v1546
        %v1548 = vpop.f32.mrb[0].mxu0
        %1549 = vdwg.mxu0
        %v1550 = vld [vmem:[#allocation2] sm:$0xfc]
        %v1551 = vld [vmem:[#allocation2 + $0x8] sm:$0xfc]
        %v1552 = vld [vmem:[#allocation2 + $0x20] sm:$0x3]
        %v1553 = vld [vmem:[#allocation2 + $0x28] sm:$0x3]
        %v1554 = vpack.c.bf16 %v1279, %v1550
        %v1555 = vpack.c.bf16 %v1280, %v1551
        %v1556 = vpack.c.bf16 %v1552, %v1552
        %v1557 = vpack.c.bf16 %v1553, %v1553
        %s1558 = scalar_lea.vmem [#allocation8], 576
        %v1559 = vld [vmem:[%s1558] sm:$0xf]
        %v1560 = vld [vmem:[%s1558 + $0x4] sm:$0xf]
        %v1561 = vld [vmem:[%s1558 + $0x8] sm:$0xf]
        %v1562 = vld [vmem:[%s1558 + $0xc] sm:$0xf]
        %v1563 = vld [vmem:[%s1558 + $0x10] sm:$0xf]
        %v1564 = vld [vmem:[%s1558 + $0x14] sm:$0xf]
        %v1565 = vld [vmem:[%s1558 + $0x18] sm:$0xf]
        %v1566 = vld [vmem:[%s1558 + $0x1c] sm:$0xf]
        %v1567 = vld [vmem:[%s1558 + $0x20] sm:$0xf]
        %v1568 = vld [vmem:[%s1558 + $0x24] sm:$0xf]
        %v1569 = vld [vmem:[%s1558 + $0x28] sm:$0xf]
        %v1570 = vld [vmem:[%s1558 + $0x2c] sm:$0xf]
        %v1571 = vld [vmem:[%s1558 + $0x30] sm:$0xf]
        %v1572 = vld [vmem:[%s1558 + $0x34] sm:$0xf]
        %v1573 = vld [vmem:[%s1558 + $0x38] sm:$0xf]
        %v1574 = vld [vmem:[%s1558 + $0x3c] sm:$0xf]
        %v1575 = vld [vmem:[%s1558 + $0x40] sm:$0xf]
        %v1576 = vld [vmem:[%s1558 + $0x44] sm:$0xf]
        %v1581 = vrot.slane %v1554, 1
        %v1582 = vrot.slane %v1556, 1
        %v1583 = vsel %vm694, %v1581, %v1582
        %v1584 = vrot.slane %v1555, 1
        %v1585 = vrot.slane %v1557, 1
        %v1586 = vsel %vm694, %v1584, %v1585
        %v1606 = vunpack.c.l.b16 %v1559
        %v1607 = vunpack.c.l.b16 %v1560
        %v1608 = vunpack.c.l.b16 %v1561
        %v1609 = vunpack.c.l.b16 %v1562
        %v1610 = vunpack.c.l.b16 %v1563
        %v1611 = vunpack.c.l.b16 %v1564
        %v1612 = vunpack.c.l.b16 %v1565
        %v1613 = vunpack.c.l.b16 %v1566
        %v1614 = vunpack.c.l.b16 %v1567
        %v1615 = vunpack.c.l.b16 %v1568
        %v1616 = vunpack.c.l.b16 %v1569
        %v1617 = vunpack.c.l.b16 %v1570
        %v1618 = vunpack.c.l.b16 %v1571
        %v1619 = vunpack.c.l.b16 %v1572
        %v1620 = vunpack.c.l.b16 %v1573
        %v1621 = vunpack.c.l.b16 %v1574
        %v1622 = vunpack.c.l.b16 %v1575
        %v1623 = vunpack.c.l.b16 %v1576
        %v1624 = vpack.c.b16 %v1607, %v1606
        %v1625 = vpack.c.b16 %v1609, %v1608
        %v1626 = vpack.c.b16 %v1611, %v1610
        %v1627 = vpack.c.b16 %v1613, %v1612
        %v1628 = vpack.c.b16 %v1615, %v1614
        %v1629 = vpack.c.b16 %v1617, %v1616
        %v1630 = vpack.c.b16 %v1619, %v1618
        %v1631 = vpack.c.b16 %v1621, %v1620
        %v1632 = vpack.c.b16 %v1623, %v1622
        %v1643 = vsel %vm520, %v1586, 0
        %1645 = vmatprep.subr.bf16.mxu0 0
        %1646 = vmatpush1.bf16.msra.mxu0 %v1624
        %1647 = vmatprep.subr.bf16.mxu0 0
        %1648 = vmatpush1.bf16.msra.mxu0 %v1625
        %1649 = vmatprep.subr.bf16.mxu0 0
        %1650 = vmatpush1.bf16.msra.mxu0 %v1626
        %1651 = vmatprep.subr.bf16.mxu0 0
        %1652 = vmatpush1.bf16.msra.mxu0 %v1627
        %1653 = vmatprep.subr.bf16.mxu0 0
        %1654 = vmatpush1.bf16.msra.mxu0 %v1628
        %1655 = vmatprep.subr.bf16.mxu0 0
        %1656 = vmatpush1.bf16.msra.mxu0 %v1629
        %1657 = vmatprep.subr.bf16.mxu0 0
        %1658 = vmatpush1.bf16.msra.mxu0 %v1630
        %1659 = vmatprep.subr.bf16.mxu0 0
        %1660 = vmatpush1.bf16.msra.mxu0 %v1631
        %1661 = vmatprep.subr.bf16.mxu0 0
        %1662 = vmatpush1.bf16.msra.mxu0 %v1632
        %1663 = vmatprep.subr.bf16.mxu0 0
        %1664 = vmatpush1.bf16.msra.mxu0 0
        %1665 = vmatprep.subr.bf16.mxu0 0
        %1666 = vmatpush1.bf16.msra.mxu0 0
        %1667 = vmatprep.subr.bf16.mxu0 0
        %1668 = vmatpush1.bf16.msra.mxu0 0
        %1669 = vmatprep.subr.bf16.mxu0 0
        %1670 = vmatpush1.bf16.msra.mxu0 0
        %1671 = vmatprep.subr.bf16.mxu0 0
        %1672 = vmatpush1.bf16.msra.mxu0 0
        %1673 = vmatprep.subr.bf16.mxu0 0
        %1674 = vmatpush1.bf16.msra.mxu0 0
        %1675 = vmatprep.subr.bf16.mxu0 0
        %1676 = vmatpush1.bf16.msra.mxu0 0
        %1677 = vmatprep.mubr.bf16.mxu0 %v1643
        %1678 = vmatmul.mubr.bf16.gmra.mrb[0].mxu0 %v1583
        %v1679 = vpop.f32.mrb[0].mxu0
        %v1680 = vadd.f32 0.0, %v1679
        %v1681 = vpop.f32.mrb[0].mxu0
        %v1682 = vpop.f32.mrb[0].mxu0
        %v1683 = vadd.f32 0.0, %v1682
        %v1684 = vpop.f32.mrb[0].mxu0
        %1685 = vdwg.mxu0
        %v1686 = vadd.f32 %v1544, %v1680
        %v1687 = vadd.f32 %v1547, %v1683
        %v1688 = vld [vmem:[%s3 + $0x2] sm:$0x1]
        %v1689 = vlaneseq
        %v1690 = vshrl.u32 %v1689, 7
        %v1691 = vsub.s32 0, %v1690
        %v1692 = vrot.slane %v1688, %v1691
        %v1693 = vadd.f32 %v1686, %v1692
        %v1694 = vadd.f32 %v1687, %v1692
        %v1695 = vmax.f32 %v1693, 0.0
        %v1696 = vmax.f32 %v1694, 0.0
        %v1699 = vrot.slane %v1695, 7
        %v1700 = vrot.slane %v1696, 7
        %v1701 = vsel %vm365, %v1699, %v1700
        %1702 = vrot.lane.b32.xlu0 %v1699, 8
        %v1703 = vpop.permute.xlu0 %1702
        %1704 = vrot.lane.b32.xlu0 %v1701, 8
        %v1705 = vpop.permute.xlu0 %1704
        %1706 = vrot.lane.b32.xlu0 %v1700, 8
        %v1707 = vpop.permute.xlu0 %1706
        %1711 = vst.msk [vmem:[#allocation2] sm:$0xfe] %vm378, %v1703
        %1712 = vst.msk [vmem:[#allocation2 + $0x8] sm:$0xfe] %vm380, %v1703
        %1713 = vst.msk [vmem:[#allocation2 + $0x10] sm:$0xff] %vm382, %v1705
        %1714 = vst.msk [vmem:[#allocation2 + $0x18] sm:$0xff] %vm349, %v1705
        %1715 = vst.msk [vmem:[#allocation2 + $0x20] sm:$0x1] %vm385, %v1707
        %1716 = vst.msk [vmem:[#allocation2 + $0x28] sm:$0x1] %vm387, %v1707
        %v1717 = vld [vmem:[#allocation2] sm:$0xff]
        %v1718 = vld [vmem:[#allocation2 + $0x8] sm:$0xff]
        %v1719 = vld [vmem:[#allocation2 + $0x10] sm:$0xff]
        %v1720 = vld [vmem:[#allocation2 + $0x18] sm:$0xff]
        %v1721 = vpack.c.bf16 %v1719, %v1717
        %v1722 = vpack.c.bf16 %v1720, %v1718
        %s1723 = scalar_lea.vmem [#allocation8], 648
        %v1724 = vld [vmem:[%s1723] sm:$0xf]
        %v1725 = vld [vmem:[%s1723 + $0x4] sm:$0xf]
        %v1726 = vld [vmem:[%s1723 + $0x8] sm:$0xf]
        %v1727 = vld [vmem:[%s1723 + $0xc] sm:$0xf]
        %v1728 = vld [vmem:[%s1723 + $0x10] sm:$0xf]
        %v1729 = vld [vmem:[%s1723 + $0x14] sm:$0xf]
        %v1730 = vld [vmem:[%s1723 + $0x18] sm:$0xf]
        %v1731 = vld [vmem:[%s1723 + $0x1c] sm:$0xf]
        %v1732 = vld [vmem:[%s1723 + $0x20] sm:$0xf]
        %v1733 = vld [vmem:[%s1723 + $0x24] sm:$0xf]
        %v1734 = vld [vmem:[%s1723 + $0x28] sm:$0xf]
        %v1735 = vld [vmem:[%s1723 + $0x2c] sm:$0xf]
        %v1736 = vld [vmem:[%s1723 + $0x30] sm:$0xf]
        %v1737 = vld [vmem:[%s1723 + $0x34] sm:$0xf]
        %v1738 = vld [vmem:[%s1723 + $0x38] sm:$0xf]
        %v1739 = vld [vmem:[%s1723 + $0x3c] sm:$0xf]
        %v1740 = vld [vmem:[%s1723 + $0x40] sm:$0xf]
        %v1741 = vld [vmem:[%s1723 + $0x44] sm:$0xf]
        %v1742 = vld [vmem:[#allocation2] sm:$0xfe]
        %v1743 = vld [vmem:[#allocation2 + $0x8] sm:$0xfe]
        %v1744 = vld [vmem:[#allocation2 + $0x20] sm:$0x1]
        %v1745 = vld [vmem:[#allocation2 + $0x28] sm:$0x1]
        %v1746 = vpack.c.bf16 %v1719, %v1742
        %v1747 = vpack.c.bf16 %v1720, %v1743
        %v1748 = vpack.c.bf16 %v1744, %v1744
        %v1749 = vpack.c.bf16 %v1745, %v1745
        %s1750 = scalar_lea.vmem [#allocation8], 720
        %v1751 = vld [vmem:[%s1750] sm:$0xf]
        %v1752 = vld [vmem:[%s1750 + $0x4] sm:$0xf]
        %v1753 = vld [vmem:[%s1750 + $0x8] sm:$0xf]
        %v1754 = vld [vmem:[%s1750 + $0xc] sm:$0xf]
        %v1755 = vld [vmem:[%s1750 + $0x10] sm:$0xf]
        %v1756 = vld [vmem:[%s1750 + $0x14] sm:$0xf]
        %v1757 = vld [vmem:[%s1750 + $0x18] sm:$0xf]
        %v1758 = vld [vmem:[%s1750 + $0x1c] sm:$0xf]
        %v1759 = vld [vmem:[%s1750 + $0x20] sm:$0xf]
        %v1760 = vld [vmem:[%s1750 + $0x24] sm:$0xf]
        %v1761 = vld [vmem:[%s1750 + $0x28] sm:$0xf]
        %v1762 = vld [vmem:[%s1750 + $0x2c] sm:$0xf]
        %v1763 = vld [vmem:[%s1750 + $0x30] sm:$0xf]
        %v1764 = vld [vmem:[%s1750 + $0x34] sm:$0xf]
        %v1765 = vld [vmem:[%s1750 + $0x38] sm:$0xf]
        %v1766 = vld [vmem:[%s1750 + $0x3c] sm:$0xf]
        %v1767 = vld [vmem:[%s1750 + $0x40] sm:$0xf]
        %v1768 = vld [vmem:[%s1750 + $0x44] sm:$0xf]
        %v1770 = vshrl.u32 %v1746, 16
        %v1772 = vshll.u32 %v1746, 16
        %v1774 = vrot.slane %v1772, 1
        %v1775 = vor.u32 %v1770, %v1774
        %v1777 = vshll.u32 %v1748, 16
        %v1779 = vrot.slane %v1777, 1
        %v1780 = vsel %vm440, %v1775, %v1779
        %v1782 = vshrl.u32 %v1747, 16
        %v1784 = vshll.u32 %v1747, 16
        %v1786 = vrot.slane %v1784, 1
        %v1787 = vor.u32 %v1782, %v1786
        %v1789 = vshll.u32 %v1749, 16
        %v1791 = vrot.slane %v1789, 1
        %v1792 = vsel %vm440, %v1787, %v1791
        %v1812 = vunpack.c.l.b16 %v1751
        %v1813 = vunpack.c.l.b16 %v1752
        %v1814 = vunpack.c.l.b16 %v1753
        %v1815 = vunpack.c.l.b16 %v1754
        %v1816 = vunpack.c.l.b16 %v1755
        %v1817 = vunpack.c.l.b16 %v1756
        %v1818 = vunpack.c.l.b16 %v1757
        %v1819 = vunpack.c.l.b16 %v1758
        %v1820 = vunpack.c.l.b16 %v1759
        %v1821 = vunpack.c.l.b16 %v1760
        %v1822 = vunpack.c.l.b16 %v1761
        %v1823 = vunpack.c.l.b16 %v1762
        %v1824 = vunpack.c.l.b16 %v1763
        %v1825 = vunpack.c.l.b16 %v1764
        %v1826 = vunpack.c.l.b16 %v1765
        %v1827 = vunpack.c.l.b16 %v1766
        %v1828 = vunpack.c.l.b16 %v1767
        %v1829 = vunpack.c.l.b16 %v1768
        %v1830 = vpack.c.b16 %v1813, %v1812
        %v1831 = vpack.c.b16 %v1815, %v1814
        %v1832 = vpack.c.b16 %v1817, %v1816
        %v1833 = vpack.c.b16 %v1819, %v1818
        %v1834 = vpack.c.b16 %v1821, %v1820
        %v1835 = vpack.c.b16 %v1823, %v1822
        %v1836 = vpack.c.b16 %v1825, %v1824
        %v1837 = vpack.c.b16 %v1827, %v1826
        %v1838 = vpack.c.b16 %v1829, %v1828
        %v1849 = vsel %vm520, %v1792, 0
        %1851 = vmatprep.subr.bf16.mxu0 0
        %1852 = vmatpush1.bf16.msra.mxu0 %v1830
        %1853 = vmatprep.subr.bf16.mxu0 0
        %1854 = vmatpush1.bf16.msra.mxu0 %v1831
        %1855 = vmatprep.subr.bf16.mxu0 0
        %1856 = vmatpush1.bf16.msra.mxu0 %v1832
        %1857 = vmatprep.subr.bf16.mxu0 0
        %1858 = vmatpush1.bf16.msra.mxu0 %v1833
        %1859 = vmatprep.subr.bf16.mxu0 0
        %1860 = vmatpush1.bf16.msra.mxu0 %v1834
        %1861 = vmatprep.subr.bf16.mxu0 0
        %1862 = vmatpush1.bf16.msra.mxu0 %v1835
        %1863 = vmatprep.subr.bf16.mxu0 0
        %1864 = vmatpush1.bf16.msra.mxu0 %v1836
        %1865 = vmatprep.subr.bf16.mxu0 0
        %1866 = vmatpush1.bf16.msra.mxu0 %v1837
        %1867 = vmatprep.subr.bf16.mxu0 0
        %1868 = vmatpush1.bf16.msra.mxu0 %v1838
        %1869 = vmatprep.subr.bf16.mxu0 0
        %1870 = vmatpush1.bf16.msra.mxu0 0
        %1871 = vmatprep.subr.bf16.mxu0 0
        %1872 = vmatpush1.bf16.msra.mxu0 0
        %1873 = vmatprep.subr.bf16.mxu0 0
        %1874 = vmatpush1.bf16.msra.mxu0 0
        %1875 = vmatprep.subr.bf16.mxu0 0
        %1876 = vmatpush1.bf16.msra.mxu0 0
        %1877 = vmatprep.subr.bf16.mxu0 0
        %1878 = vmatpush1.bf16.msra.mxu0 0
        %1879 = vmatprep.subr.bf16.mxu0 0
        %1880 = vmatpush1.bf16.msra.mxu0 0
        %1881 = vmatprep.subr.bf16.mxu0 0
        %1882 = vmatpush1.bf16.msra.mxu0 0
        %1883 = vmatprep.mubr.bf16.mxu0 %v1849
        %1884 = vmatmul.mubr.bf16.gmra.mrb[0].mxu0 %v1780
        %v1885 = vpop.f32.mrb[0].mxu0
        %v1886 = vadd.f32 0.0, %v1885
        %v1887 = vpop.f32.mrb[0].mxu0
        %v1888 = vpop.f32.mrb[0].mxu0
        %v1889 = vadd.f32 0.0, %v1888
        %v1890 = vpop.f32.mrb[0].mxu0
        %1891 = vdwg.mxu0
        %v1910 = vunpack.c.l.b16 %v1724
        %v1911 = vunpack.c.l.b16 %v1725
        %v1912 = vunpack.c.l.b16 %v1726
        %v1913 = vunpack.c.l.b16 %v1727
        %v1914 = vunpack.c.l.b16 %v1728
        %v1915 = vunpack.c.l.b16 %v1729
        %v1916 = vunpack.c.l.b16 %v1730
        %v1917 = vunpack.c.l.b16 %v1731
        %v1918 = vunpack.c.l.b16 %v1732
        %v1919 = vunpack.c.l.b16 %v1733
        %v1920 = vunpack.c.l.b16 %v1734
        %v1921 = vunpack.c.l.b16 %v1735
        %v1922 = vunpack.c.l.b16 %v1736
        %v1923 = vunpack.c.l.b16 %v1737
        %v1924 = vunpack.c.l.b16 %v1738
        %v1925 = vunpack.c.l.b16 %v1739
        %v1926 = vunpack.c.l.b16 %v1740
        %v1927 = vunpack.c.l.b16 %v1741
        %v1928 = vpack.c.b16 %v1911, %v1910
        %v1929 = vpack.c.b16 %v1913, %v1912
        %v1930 = vpack.c.b16 %v1915, %v1914
        %v1931 = vpack.c.b16 %v1917, %v1916
        %v1932 = vpack.c.b16 %v1919, %v1918
        %v1933 = vpack.c.b16 %v1921, %v1920
        %v1934 = vpack.c.b16 %v1923, %v1922
        %v1935 = vpack.c.b16 %v1925, %v1924
        %v1936 = vpack.c.b16 %v1927, %v1926
        %v1947 = vsel %vm520, %v1722, 0
        %1949 = vmatprep.subr.bf16.mxu0 0
        %1950 = vmatpush1.bf16.msra.mxu0 %v1928
        %1951 = vmatprep.subr.bf16.mxu0 0
        %1952 = vmatpush1.bf16.msra.mxu0 %v1929
        %1953 = vmatprep.subr.bf16.mxu0 0
        %1954 = vmatpush1.bf16.msra.mxu0 %v1930
        %1955 = vmatprep.subr.bf16.mxu0 0
        %1956 = vmatpush1.bf16.msra.mxu0 %v1931
        %1957 = vmatprep.subr.bf16.mxu0 0
        %1958 = vmatpush1.bf16.msra.mxu0 %v1932
        %1959 = vmatprep.subr.bf16.mxu0 0
        %1960 = vmatpush1.bf16.msra.mxu0 %v1933
        %1961 = vmatprep.subr.bf16.mxu0 0
        %1962 = vmatpush1.bf16.msra.mxu0 %v1934
        %1963 = vmatprep.subr.bf16.mxu0 0
        %1964 = vmatpush1.bf16.msra.mxu0 %v1935
        %1965 = vmatprep.subr.bf16.mxu0 0
        %1966 = vmatpush1.bf16.msra.mxu0 %v1936
        %1967 = vmatprep.subr.bf16.mxu0 0
        %1968 = vmatpush1.bf16.msra.mxu0 0
        %1969 = vmatprep.subr.bf16.mxu0 0
        %1970 = vmatpush1.bf16.msra.mxu0 0
        %1971 = vmatprep.subr.bf16.mxu0 0
        %1972 = vmatpush1.bf16.msra.mxu0 0
        %1973 = vmatprep.subr.bf16.mxu0 0
        %1974 = vmatpush1.bf16.msra.mxu0 0
        %1975 = vmatprep.subr.bf16.mxu0 0
        %1976 = vmatpush1.bf16.msra.mxu0 0
        %1977 = vmatprep.subr.bf16.mxu0 0
        %1978 = vmatpush1.bf16.msra.mxu0 0
        %1979 = vmatprep.subr.bf16.mxu0 0
        %1980 = vmatpush1.bf16.msra.mxu0 0
        %1981 = vmatprep.mubr.bf16.mxu0 %v1947
        %1982 = vmatmul.mubr.bf16.gmra.mrb[0].mxu0 %v1721
        %v1983 = vpop.f32.mrb[0].mxu0
        %v1984 = vadd.f32 %v1886, %v1983
        %v1985 = vpop.f32.mrb[0].mxu0
        %v1986 = vpop.f32.mrb[0].mxu0
        %v1987 = vadd.f32 %v1889, %v1986
        %v1988 = vpop.f32.mrb[0].mxu0
        %1989 = vdwg.mxu0
        %v1990 = vld [vmem:[#allocation2] sm:$0xfc]
        %v1991 = vld [vmem:[#allocation2 + $0x8] sm:$0xfc]
        %v1992 = vld [vmem:[#allocation2 + $0x20] sm:$0x3]
        %v1993 = vld [vmem:[#allocation2 + $0x28] sm:$0x3]
        %v1994 = vpack.c.bf16 %v1719, %v1990
        %v1995 = vpack.c.bf16 %v1720, %v1991
        %v1996 = vpack.c.bf16 %v1992, %v1992
        %v1997 = vpack.c.bf16 %v1993, %v1993
        %s1998 = scalar_lea.vmem [#allocation8], 792
        %v1999 = vld [vmem:[%s1998] sm:$0xf]
        %v2000 = vld [vmem:[%s1998 + $0x4] sm:$0xf]
        %v2001 = vld [vmem:[%s1998 + $0x8] sm:$0xf]
        %v2002 = vld [vmem:[%s1998 + $0xc] sm:$0xf]
        %v2003 = vld [vmem:[%s1998 + $0x10] sm:$0xf]
        %v2004 = vld [vmem:[%s1998 + $0x14] sm:$0xf]
        %v2005 = vld [vmem:[%s1998 + $0x18] sm:$0xf]
        %v2006 = vld [vmem:[%s1998 + $0x1c] sm:$0xf]
        %v2007 = vld [vmem:[%s1998 + $0x20] sm:$0xf]
        %v2008 = vld [vmem:[%s1998 + $0x24] sm:$0xf]
        %v2009 = vld [vmem:[%s1998 + $0x28] sm:$0xf]
        %v2010 = vld [vmem:[%s1998 + $0x2c] sm:$0xf]
        %v2011 = vld [vmem:[%s1998 + $0x30] sm:$0xf]
        %v2012 = vld [vmem:[%s1998 + $0x34] sm:$0xf]
        %v2013 = vld [vmem:[%s1998 + $0x38] sm:$0xf]
        %v2014 = vld [vmem:[%s1998 + $0x3c] sm:$0xf]
        %v2015 = vld [vmem:[%s1998 + $0x40] sm:$0xf]
        %v2016 = vld [vmem:[%s1998 + $0x44] sm:$0xf]
        %v2021 = vrot.slane %v1994, 1
        %v2022 = vrot.slane %v1996, 1
        %v2023 = vsel %vm694, %v2021, %v2022
        %v2024 = vrot.slane %v1995, 1
        %v2025 = vrot.slane %v1997, 1
        %v2026 = vsel %vm694, %v2024, %v2025
        %v2046 = vunpack.c.l.b16 %v1999
        %v2047 = vunpack.c.l.b16 %v2000
        %v2048 = vunpack.c.l.b16 %v2001
        %v2049 = vunpack.c.l.b16 %v2002
        %v2050 = vunpack.c.l.b16 %v2003
        %v2051 = vunpack.c.l.b16 %v2004
        %v2052 = vunpack.c.l.b16 %v2005
        %v2053 = vunpack.c.l.b16 %v2006
        %v2054 = vunpack.c.l.b16 %v2007
        %v2055 = vunpack.c.l.b16 %v2008
        %v2056 = vunpack.c.l.b16 %v2009
        %v2057 = vunpack.c.l.b16 %v2010
        %v2058 = vunpack.c.l.b16 %v2011
        %v2059 = vunpack.c.l.b16 %v2012
        %v2060 = vunpack.c.l.b16 %v2013
        %v2061 = vunpack.c.l.b16 %v2014
        %v2062 = vunpack.c.l.b16 %v2015
        %v2063 = vunpack.c.l.b16 %v2016
        %v2064 = vpack.c.b16 %v2047, %v2046
        %v2065 = vpack.c.b16 %v2049, %v2048
        %v2066 = vpack.c.b16 %v2051, %v2050
        %v2067 = vpack.c.b16 %v2053, %v2052
        %v2068 = vpack.c.b16 %v2055, %v2054
        %v2069 = vpack.c.b16 %v2057, %v2056
        %v2070 = vpack.c.b16 %v2059, %v2058
        %v2071 = vpack.c.b16 %v2061, %v2060
        %v2072 = vpack.c.b16 %v2063, %v2062
        %v2083 = vsel %vm520, %v2026, 0
        %2085 = vmatprep.subr.bf16.mxu0 0
        %2086 = vmatpush1.bf16.msra.mxu0 %v2064
        %2087 = vmatprep.subr.bf16.mxu0 0
        %2088 = vmatpush1.bf16.msra.mxu0 %v2065
        %2089 = vmatprep.subr.bf16.mxu0 0
        %2090 = vmatpush1.bf16.msra.mxu0 %v2066
        %2091 = vmatprep.subr.bf16.mxu0 0
        %2092 = vmatpush1.bf16.msra.mxu0 %v2067
        %2093 = vmatprep.subr.bf16.mxu0 0
        %2094 = vmatpush1.bf16.msra.mxu0 %v2068
        %2095 = vmatprep.subr.bf16.mxu0 0
        %2096 = vmatpush1.bf16.msra.mxu0 %v2069
        %2097 = vmatprep.subr.bf16.mxu0 0
        %2098 = vmatpush1.bf16.msra.mxu0 %v2070
        %2099 = vmatprep.subr.bf16.mxu0 0
        %2100 = vmatpush1.bf16.msra.mxu0 %v2071
        %2101 = vmatprep.subr.bf16.mxu0 0
        %2102 = vmatpush1.bf16.msra.mxu0 %v2072
        %2103 = vmatprep.subr.bf16.mxu0 0
        %2104 = vmatpush1.bf16.msra.mxu0 0
        %2105 = vmatprep.subr.bf16.mxu0 0
        %2106 = vmatpush1.bf16.msra.mxu0 0
        %2107 = vmatprep.subr.bf16.mxu0 0
        %2108 = vmatpush1.bf16.msra.mxu0 0
        %2109 = vmatprep.subr.bf16.mxu0 0
        %2110 = vmatpush1.bf16.msra.mxu0 0
        %2111 = vmatprep.subr.bf16.mxu0 0
        %2112 = vmatpush1.bf16.msra.mxu0 0
        %2113 = vmatprep.subr.bf16.mxu0 0
        %2114 = vmatpush1.bf16.msra.mxu0 0
        %2115 = vmatprep.subr.bf16.mxu0 0
        %2116 = vmatpush1.bf16.msra.mxu0 0
        %2117 = vmatprep.mubr.bf16.mxu0 %v2083
        %2118 = vmatmul.mubr.bf16.gmra.mrb[0].mxu0 %v2023
        %v2119 = vpop.f32.mrb[0].mxu0
        %v2120 = vadd.f32 0.0, %v2119
        %v2121 = vpop.f32.mrb[0].mxu0
        %v2122 = vpop.f32.mrb[0].mxu0
        %v2123 = vadd.f32 0.0, %v2122
        %v2124 = vpop.f32.mrb[0].mxu0
        %2125 = vdwg.mxu0
        %v2126 = vadd.f32 %v1984, %v2120
        %v2127 = vadd.f32 %v1987, %v2123
        %v2128 = vld [vmem:[%s3 + $0x3] sm:$0x1]
        %v2129 = vlaneseq
        %v2130 = vshrl.u32 %v2129, 7
        %v2131 = vsub.s32 0, %v2130
        %v2132 = vrot.slane %v2128, %v2131
        %v2133 = vadd.f32 %v2126, %v2132
        %v2134 = vadd.f32 %v2127, %v2132
        %v2135 = vadd.f32 %v2133, %v1253
        %v2136 = vadd.f32 %v2134, %v1254
        %v2137 = vpack.c.bf16 %v2136, %v2135
        %v2138 = vld [vmem:[#allocation9] sm:$0xff]
        %v2139 = vld [vmem:[#allocation9 + $0x8] sm:$0xff]
        %v2140 = vld [vmem:[#allocation9 + $0x10] sm:$0xff]
        %v2141 = vld [vmem:[#allocation9 + $0x18] sm:$0xff]
        %v2142 = vld [vmem:[#allocation9 + $0x20] sm:$0xff]
        %v2143 = vld [vmem:[#allocation9 + $0x28] sm:$0xff]
        %v2144 = vld [vmem:[#allocation9 + $0x30] sm:$0xff]
        %v2145 = vld [vmem:[#allocation9 + $0x38] sm:$0xff]
        %v2146 = vld [vmem:[#allocation9 + $0x40] sm:$0xff]
        %v2147 = vld [vmem:[#allocation9 + $0x48] sm:$0xff]
        %v2148 = vld [vmem:[#allocation9 + $0x50] sm:$0xff]
        %v2149 = vld [vmem:[#allocation9 + $0x58] sm:$0xff]
        %v2150 = vld [vmem:[#allocation9 + $0x60] sm:$0xff]
        %v2151 = vld [vmem:[#allocation9 + $0x68] sm:$0xff]
        %v2152 = vld [vmem:[#allocation9 + $0x70] sm:$0xff]
        %v2153 = vld [vmem:[#allocation9 + $0x78] sm:$0xff]
        %v2170 = vunpack.c.l.b16 %v2138
        %v2171 = vunpack.c.h.b16 %v2138
        %v2172 = vunpack.c.l.b16 %v2139
        %v2173 = vunpack.c.h.b16 %v2139
        %v2174 = vunpack.c.l.b16 %v2140
        %v2175 = vunpack.c.h.b16 %v2140
        %v2176 = vunpack.c.l.b16 %v2141
        %v2177 = vunpack.c.h.b16 %v2141
        %v2178 = vunpack.c.l.b16 %v2142
        %v2179 = vunpack.c.h.b16 %v2142
        %v2180 = vunpack.c.l.b16 %v2143
        %v2181 = vunpack.c.h.b16 %v2143
        %v2182 = vunpack.c.l.b16 %v2144
        %v2183 = vunpack.c.h.b16 %v2144
        %v2184 = vunpack.c.l.b16 %v2145
        %v2185 = vunpack.c.h.b16 %v2145
        %v2186 = vunpack.c.l.b16 %v2146
        %v2187 = vunpack.c.h.b16 %v2146
        %v2188 = vunpack.c.l.b16 %v2147
        %v2189 = vunpack.c.h.b16 %v2147
        %v2190 = vunpack.c.l.b16 %v2148
        %v2191 = vunpack.c.h.b16 %v2148
        %v2192 = vunpack.c.l.b16 %v2149
        %v2193 = vunpack.c.h.b16 %v2149
        %v2194 = vunpack.c.l.b16 %v2150
        %v2195 = vunpack.c.h.b16 %v2150
        %v2196 = vunpack.c.l.b16 %v2151
        %v2197 = vunpack.c.h.b16 %v2151
        %v2198 = vunpack.c.l.b16 %v2152
        %v2199 = vunpack.c.h.b16 %v2152
        %v2200 = vunpack.c.l.b16 %v2153
        %v2201 = vunpack.c.h.b16 %v2153
        %v2202 = vpack.c.b16 %v2172, %v2170
        %v2203 = vpack.c.b16 %v2173, %v2171
        %v2204 = vpack.c.b16 %v2176, %v2174
        %v2205 = vpack.c.b16 %v2177, %v2175
        %v2206 = vpack.c.b16 %v2180, %v2178
        %v2207 = vpack.c.b16 %v2181, %v2179
        %v2208 = vpack.c.b16 %v2184, %v2182
        %v2209 = vpack.c.b16 %v2185, %v2183
        %v2210 = vpack.c.b16 %v2188, %v2186
        %v2211 = vpack.c.b16 %v2189, %v2187
        %v2212 = vpack.c.b16 %v2192, %v2190
        %v2213 = vpack.c.b16 %v2193, %v2191
        %v2214 = vpack.c.b16 %v2196, %v2194
        %v2215 = vpack.c.b16 %v2197, %v2195
        %v2216 = vpack.c.b16 %v2200, %v2198
        %v2217 = vpack.c.b16 %v2201, %v2199
        %2234 = vmatprep.subr.bf16.mxu0 %v2203
        %2235 = vmatpush1.bf16.msra.mxu0 %v2202
        %2236 = vmatprep.subr.bf16.mxu0 %v2205
        %2237 = vmatpush1.bf16.msra.mxu0 %v2204
        %2238 = vmatprep.subr.bf16.mxu0 %v2207
        %2239 = vmatpush1.bf16.msra.mxu0 %v2206
        %2240 = vmatprep.subr.bf16.mxu0 %v2209
        %2241 = vmatpush1.bf16.msra.mxu0 %v2208
        %2242 = vmatprep.subr.bf16.mxu0 %v2211
        %2243 = vmatpush1.bf16.msra.mxu0 %v2210
        %2244 = vmatprep.subr.bf16.mxu0 %v2213
        %2245 = vmatpush1.bf16.msra.mxu0 %v2212
        %2246 = vmatprep.subr.bf16.mxu0 %v2215
        %2247 = vmatpush1.bf16.msra.mxu0 %v2214
        %2248 = vmatprep.subr.bf16.mxu0 %v2217
        %2249 = vmatpush1.bf16.msra.mxu0 %v2216
        %2250 = vmatprep.subr.bf16.mxu0 0
        %2251 = vmatpush1.bf16.msra.mxu0 0
        %2252 = vmatprep.subr.bf16.mxu0 0
        %2253 = vmatpush1.bf16.msra.mxu0 0
        %2254 = vmatprep.subr.bf16.mxu0 0
        %2255 = vmatpush1.bf16.msra.mxu0 0
        %2256 = vmatprep.subr.bf16.mxu0 0
        %2257 = vmatpush1.bf16.msra.mxu0 0
        %2258 = vmatprep.subr.bf16.mxu0 0
        %2259 = vmatpush1.bf16.msra.mxu0 0
        %2260 = vmatprep.subr.bf16.mxu0 0
        %2261 = vmatpush1.bf16.msra.mxu0 0
        %2262 = vmatprep.subr.bf16.mxu0 0
        %2263 = vmatpush1.bf16.msra.mxu0 0
        %2264 = vmatprep.subr.bf16.mxu0 0
        %2265 = vmatpush1.bf16.msra.mxu0 0
        %2266 = vmatprep.mubr.bf16.mxu0 0
        %2267 = vmatmul.mubr.bf16.gmra.mrb[0].mxu0 %v2137
        %v2268 = vpop.f32.mrb[0].mxu0
        %v2269 = vadd.f32 0.0, %v2268
        %v2270 = vpop.f32.mrb[0].mxu0
        %v2271 = vadd.f32 0.0, %v2270
        %v2272 = vpop.f32.mrb[0].mxu0
        %v2273 = vadd.f32 0.0, %v2272
        %v2274 = vpop.f32.mrb[0].mxu0
        %v2275 = vadd.f32 0.0, %v2274
        %2276 = vdwg.mxu0
        %v2277 = vld [vmem:[%s4] sm:$0xf]
        %v2278 = vld [vmem:[%s4 + $0x4] sm:$0xf]
        %v2279 = vld [vmem:[%s4 + $0x8] sm:$0xf]
        %v2280 = vld [vmem:[%s4 + $0xc] sm:$0xf]
        %v2281 = vpack.c.bf16 %v2273, %v2269
        %v2282 = vpack.c.bf16 %v2275, %v2271
        %v2287 = vunpack.c.l.b16 %v2277
        %v2288 = vunpack.c.l.b16 %v2278
        %v2289 = vunpack.c.l.b16 %v2279
        %v2290 = vunpack.c.l.b16 %v2280
        %v2291 = vpack.c.b16 %v2288, %v2287
        %v2292 = vpack.c.b16 %v2290, %v2289
        %v2294 = vsel %vm520, %v2291, 0
        %v2297 = vsel %vm520, %v2292, 0
        %2299 = vmatprep.subr.bf16.mxu0 %v2282
        %2300 = vmatpush1.bf16.msra.mxu0 %v2281
        %2301 = vmatprep.subr.bf16.mxu0 0
        %2302 = vmatpush1.bf16.msra.mxu0 0
        %2303 = vmatprep.subr.bf16.mxu0 0
        %2304 = vmatpush1.bf16.msra.mxu0 0
        %2305 = vmatprep.subr.bf16.mxu0 0
        %2306 = vmatpush1.bf16.msra.mxu0 0
        %2307 = vmatprep.subr.bf16.mxu0 0
        %2308 = vmatpush1.bf16.msra.mxu0 0
        %2309 = vmatprep.subr.bf16.mxu0 0
        %2310 = vmatpush1.bf16.msra.mxu0 0
        %2311 = vmatprep.subr.bf16.mxu0 0
        %2312 = vmatpush1.bf16.msra.mxu0 0
        %2313 = vmatprep.subr.bf16.mxu0 0
        %2314 = vmatpush1.bf16.msra.mxu0 0
        %2315 = vmatprep.subr.bf16.mxu0 0
        %2316 = vmatpush1.bf16.msra.mxu0 0
        %2317 = vmatprep.subr.bf16.mxu0 0
        %2318 = vmatpush1.bf16.msra.mxu0 0
        %2319 = vmatprep.subr.bf16.mxu0 0
        %2320 = vmatpush1.bf16.msra.mxu0 0
        %2321 = vmatprep.subr.bf16.mxu0 0
        %2322 = vmatpush1.bf16.msra.mxu0 0
        %2323 = vmatprep.subr.bf16.mxu0 0
        %2324 = vmatpush1.bf16.msra.mxu0 0
        %2325 = vmatprep.subr.bf16.mxu0 0
        %2326 = vmatpush1.bf16.msra.mxu0 0
        %2327 = vmatprep.subr.bf16.mxu0 0
        %2328 = vmatpush1.bf16.msra.mxu0 0
        %2329 = vmatprep.subr.bf16.mxu0 0
        %2330 = vmatpush1.bf16.msra.mxu0 0
        %2331 = vmatprep.mubr.bf16.mxu0 0
        %2332 = vmatmul.mubr.bf16.gmra.mrb[0].mxu0 %v2294
        %v2333 = vpop.f32.mrb[0].mxu0
        %v2334 = vadd.f32 0.0, %v2333
        %v2335 = vpop.f32.mrb[0].mxu0
        %v2336 = vadd.f32 0.0, %v2335
        %v2337 = vpop.f32.mrb[0].mxu0
        %v2338 = vadd.f32 0.0, %v2337
        %v2339 = vpop.f32.mrb[0].mxu0
        %v2340 = vadd.f32 0.0, %v2339
        %2341 = vmatprep.mubr.bf16.mxu0 0
        %2342 = vmatmul.mubr.bf16.gmra.mrb[0].mxu0 %v2297
        %v2343 = vpop.f32.mrb[0].mxu0
        %v2344 = vadd.f32 0.0, %v2343
        %v2345 = vpop.f32.mrb[0].mxu0
        %v2346 = vadd.f32 0.0, %v2345
        %v2347 = vpop.f32.mrb[0].mxu0
        %v2348 = vadd.f32 0.0, %v2347
        %v2349 = vpop.f32.mrb[0].mxu0
        %v2350 = vadd.f32 0.0, %v2349
        %2351 = vdwg.mxu0
        %2352 = vst [vmem:[%s338] sm:$0xff] %v2334
        %2353 = vst [vmem:[%s338 + $0x8] sm:$0xff] %v2336
        %2354 = vst [vmem:[%s338 + $0x10] sm:$0xff] %v2338
        %2355 = vst [vmem:[%s338 + $0x18] sm:$0xff] %v2340
        %2356 = vst [vmem:[%s338 + $0x20] sm:$0xff] %v2344
        %2357 = vst [vmem:[%s338 + $0x28] sm:$0xff] %v2346
        %2358 = vst [vmem:[%s338 + $0x30] sm:$0xff] %v2348
        %2359 = vst [vmem:[%s338 + $0x38] sm:$0xff] %v2350
        %s2360 = sand.u32 %s171, 1
        %s2361 = scalar_lea.sflag [#allocation5], %s2360
        %s2362 = sand.u32 %s171, 1
        %s2363 = smul.addr %s2362, 64
        %s2364 = scalar_lea.vmem [#allocation11], %s2363
        // Predicated region
        $region61: #{tpu_custom_call.1} parent=43 // pred_check
          %p2365 = pneg %p181
        $region62: #{tpu_custom_call.1} parent=43 // pred_check_branch
          %2367 = sbr.rel (%p2365) target = $region64
        $region63: #{tpu_custom_call.1} parent=43 // pred_region
          %s2369 = ssub.s32 1024, 1024
          %2370 = vsyncadd %s2361, %s2369
          %s2371 = smul.addr %s27, 8
          %s2372 = smul.addr %s2371, 128
          %s2373 = scalar_lea.hbm %s6, %s2372
          %s2374 = sshll.u32 %s2364, 4
          %s2375 = int_to_ptr.vmem [resolvable:$true] %s2374
          %2380 = dma.vmem_to_hbm [thread:$0]  %s2375, 1024, %s2373, %s2361, 256, 256, 16
        $region64: #{tpu_custom_call.1} parent=43 // pred_fallthru
          _
      $region44: #{tpu_custom_call.1} parent=5 // pred_fallthru
        _
      %p2381 = scmp.le.s32.totalorder 2, %s22
      // Predicated region
      $region65: #{tpu_custom_call.1} parent=5 // pred_check
        %p2382 = pneg %p2381
      $region66: #{tpu_custom_call.1} parent=5 // pred_check_branch
        %2384 = sbr.rel (%p2382) target = $region68
      $region67: #{tpu_custom_call.1} parent=5 // pred_region
        %s2385 = ssub.s32 %s22, 2
        // Predicated region
        $region69: #{tpu_custom_call.1} parent=67 // pred_check
          %p2386 = pneg %p187
        $region70: #{tpu_custom_call.1} parent=67 // pred_check_branch
          %2388 = sbr.rel (%p2386) target = $region72
        $region71: #{tpu_custom_call.1} parent=67 // pred_region
          %s2389 = sand.u32 %s172, 1
          %s2390 = scalar_lea.sflag [#allocation5], %s2389
          %s2391 = sand.u32 %s172, 1
          %s2392 = smul.addr %s2391, 64
          %s2393 = scalar_lea.vmem [#allocation11], %s2392
          %2394 = dma.done %s2390, 1024
        $region72: #{tpu_custom_call.1} parent=67 // pred_fallthru
          _
      $region68: #{tpu_custom_call.1} parent=5 // pred_fallthru
        _
    $region6: #{tpu_custom_call.1} parent=1 // loop_footer
      %s26 = sadd.s32 1, %s22
    $region7: #{tpu_custom_call.1} parent=1 // loop_footer_branch
      %21 = sbr.rel target = $region3
    $region8: #{tpu_custom_call.1} parent=1 // loop_exit
      _
    %2395 = vsyncpa [#allocation4], 1
    %s2396 = scalar_lea.sflag [#allocation4], 1
    %2397 = vsyncpa %s2396, 1
    %2398 = vsyncpa [#allocation7], 1
    %s2399 = scalar_lea.sflag [#allocation7], 1
    %2400 = vsyncpa %s2399, 1
    %2401 = vsyncpa [#allocation10], 1
    %2402 = vsyncpa [#allocation5], 1
    %s2403 = scalar_lea.sflag [#allocation5], 1
    %2404 = vsyncpa %s2403, 1

</llo_original>
